<compile_context>
chip_gen: v5e
topology: v5e:2x2
jax: 0.10.0
libtpu: 0.0.40
codegen_flags: <defaults>
</compile_context>

<pallas_src>
import jax
import jax.numpy as jnp
from jax.experimental import pallas as pl
from jax.experimental.pallas import tpu as pltpu

# Small synthetic dimensions (consistent with the forward's shape contract).
B, S, H, NH, FF, V = 2, 8, 32, 4, 64, 64
HD = H // NH
PAD_ID = 1          # RoBERTa pad id -> attention_mask = input_ids.ne(1)
LANE = 128

# Lane offsets of the packed big-weight slab (each matrix starts on a 128-lane
# tile boundary so in-kernel slices never straddle a lane tile).
WQKV_OFF, WO_OFF, W1_OFF, WD_OFF, W2_OFF = 0, 128, 256, 384, 512
WBIG_COLS = 5 * LANE                      # 640
# Row indices of the packed small-parameter table (one param per 128-lane row).
(R_LNE_G, R_LNE_B, R_BQKV, R_BO, R_LN1_G, R_LN1_B, R_B1, R_B2,
 R_LN2_G, R_LN2_B, R_BD, R_WP, R_BP) = range(13)
SMALL_ROWS = 16


def _layer_norm(x, g, b, eps=1e-5):
    mu = jnp.mean(x, axis=-1, keepdims=True)
    var = jnp.mean((x - mu) ** 2, axis=-1, keepdims=True)
    return (x - mu) * jax.lax.rsqrt(var + eps) * g + b


def encoder_bce_kernel(x_ref, mask_ref, y_ref, sp_ref, wb_ref,
                       probs_ref, loss_ref, qkv_sc, ctx_sc):
    f32, bf16 = jnp.float32, jnp.bfloat16
    scale = 1.0 / (HD ** 0.5)

    def srow(r, n):                       # packed small-param row -> (1, n)
        return sp_ref[r:r + 1, 0:n]

    lne_g, lne_b = srow(R_LNE_G, H), srow(R_LNE_B, H)
    bqkv = srow(R_BQKV, 3 * H)
    bo = srow(R_BO, H)
    ln1_g, ln1_b = srow(R_LN1_G, H), srow(R_LN1_B, H)
    b1, b2 = srow(R_B1, FF), srow(R_B2, H)
    ln2_g, ln2_b = srow(R_LN2_G, H), srow(R_LN2_B, H)
    bd = srow(R_BD, H)
    wp_row = srow(R_WP, H)                # out_proj weight as a (1, H) row
    bp = srow(R_BP, 1)

    wqkv = wb_ref[0:H, WQKV_OFF:WQKV_OFF + 3 * H]     # bf16 (H, 3H)
    wo = wb_ref[0:H, WO_OFF:WO_OFF + H]               # bf16 (H, H)
    w1 = wb_ref[0:H, W1_OFF:W1_OFF + FF]              # bf16 (H, FF)
    wd = wb_ref[0:H, WD_OFF:WD_OFF + H]               # bf16 (H, H)
    w2 = wb_ref[0:FF, W2_OFF:W2_OFF + H]              # bf16 (FF, H)

    # ---- embeddings LayerNorm, batch-fused over all B*S rows -------------
    x = x_ref[...]                                    # (B*S, H) f32
    h = _layer_norm(x, lne_g, lne_b)

    # ---- fused Q/K/V projection (one MXU push) ----------------------------
    qkv = jnp.dot(h.astype(bf16), wqkv, preferred_element_type=f32) + bqkv
    qkv_sc[...] = qkv.reshape(B, S, 3 * H).astype(bf16)

    # additive mask broadcast hoisted out of the head loop (no CSE in JAX)
    maskb = jnp.broadcast_to(mask_ref[...], (B, S, S))

    # ---- multi-head attention, batched over B via 3-D einsum --------------
    for hh in range(NH):                  # NH = 4, static unroll
        q = qkv_sc[:, :, hh * HD:(hh + 1) * HD]                    # (B,S,HD)
        k = qkv_sc[:, :, H + hh * HD:H + (hh + 1) * HD]
        v = qkv_sc[:, :, 2 * H + hh * HD:2 * H + (hh + 1) * HD]
        sc = jnp.einsum('bqd,bkd->bqk', q, k,
                        preferred_element_type=f32) * scale        # (B,S,S)
        sc = sc + maskb
        sc = sc - jnp.max(sc, axis=-1, keepdims=True)              # stable
        p = jnp.exp(sc)
        p = p * pl.reciprocal(jnp.sum(p, axis=-1, keepdims=True), approx=True)
        ctx = jnp.einsum('bqk,bkd->bqd', p.astype(bf16), v,
                         preferred_element_type=f32)               # (B,S,HD)
        ctx_sc[:, :, hh * HD:(hh + 1) * HD] = ctx

    # ---- single output projection over all heads/rows ---------------------
    attn = jnp.dot(ctx_sc[...].reshape(B * S, H).astype(bf16), wo,
                   preferred_element_type=f32) + bo
    h1 = _layer_norm(h + attn, ln1_g, ln1_b)

    # ---- feed-forward ------------------------------------------------------
    ff = jnp.dot(h1.astype(bf16), w1, preferred_element_type=f32) + b1
    # NOTE: tanh-approx GELU; PyTorch/HF default is exact erf GELU.
    ff = jax.nn.gelu(ff, approximate=True)
    ff = jnp.dot(ff.astype(bf16), w2, preferred_element_type=f32) + b2
    h2 = _layer_norm(h1 + ff, ln2_g, ln2_b)

    # ---- classification head: first token -> dense -> tanh -> out_proj ----
    cls = h2.reshape(B, S, H)[:, 0, :]                              # (B, H)
    dh = jnp.tanh(jnp.dot(cls.astype(bf16), wd,
                          preferred_element_type=f32) + bd)         # (B, H)
    # out_proj has a single output unit -> multiply-reduce instead of a
    # 1-lane-wide matmul.
    z = jnp.sum(dh * wp_row, axis=-1, keepdims=True) + bp           # (B, 1)

    probs_ref[...] = jax.nn.sigmoid(z)                  # torch.sigmoid(logits)

    # BCEWithLogitsLoss (mean reduction), numerically stable form:
    #   max(z,0) - z*y + log(1 + exp(-|z|))
    y = y_ref[...]                                                  # (B, 1)
    per_ex = jnp.maximum(z, 0.0) - z * y + jnp.log(1.0 + jnp.exp(-jnp.abs(z)))
    loss_ref[...] = jnp.mean(per_ex, keepdims=True)                 # (1, 1)


def init_params(key):
    ks = jax.random.split(key, 10)

    def nrm(k, shape):
        return (0.02 * jax.random.normal(k, shape)).astype(jnp.float32)

    ones = lambda s: jnp.ones(s, jnp.float32)
    zeros = lambda s: jnp.zeros(s, jnp.float32)
    return {
        "word_emb": nrm(ks[0], (V, H)),
        "pos_emb": nrm(ks[1], (S, H)),
        "lne_g": ones((1, H)), "lne_b": zeros((1, H)),
        "wq": nrm(ks[2], (H, H)), "bq": zeros((1, H)),
        "wk": nrm(ks[3], (H, H)), "bk": zeros((1, H)),
        "wv": nrm(ks[4], (H, H)), "bv": zeros((1, H)),
        "wo": nrm(ks[5], (H, H)), "bo": zeros((1, H)),
        "ln1_g": ones((1, H)), "ln1_b": zeros((1, H)),
        "w1": nrm(ks[6], (H, FF)), "b1": zeros((1, FF)),
        "w2": nrm(ks[7], (FF, H)), "b2": zeros((1, H)),
        "ln2_g": ones((1, H)), "ln2_b": zeros((1, H)),
        "wd": nrm(ks[8], (H, H)), "bd": zeros((1, H)),
        "wp": nrm(ks[9], (H, 1)), "bp": zeros((1, 1)),
    }


def pack_params(p):
    """Pack parameters into kernel-ready slabs (done once, outside jit)."""
    def row128(v):
        v = jnp.asarray(v, jnp.float32).reshape(1, -1)
        return jnp.pad(v, ((0, 0), (0, LANE - v.shape[1])))

    rows = [
        row128(p["lne_g"]), row128(p["lne_b"]),
        row128(jnp.concatenate([p["bq"], p["bk"], p["bv"]], axis=-1)),
        row128(p["bo"]),
        row128(p["ln1_g"]), row128(p["ln1_b"]),
        row128(p["b1"]), row128(p["b2"]),
        row128(p["ln2_g"]), row128(p["ln2_b"]),
        row128(p["bd"]),
        row128(p["wp"].T),
        row128(p["bp"]),
    ]
    small = jnp.concatenate(rows, axis=0)                           # (13,128)
    small = jnp.pad(small, ((0, SMALL_ROWS - small.shape[0]), (0, 0)))

    wqkv = jnp.concatenate([p["wq"], p["wk"], p["wv"]], axis=1)     # (H, 3H)
    wbig = jnp.zeros((FF, WBIG_COLS), jnp.float32)
    wbig = wbig.at[:H, WQKV_OFF:WQKV_OFF + 3 * H].set(wqkv)
    wbig = wbig.at[:H, WO_OFF:WO_OFF + H].set(p["wo"])
    wbig = wbig.at[:H, W1_OFF:W1_OFF + FF].set(p["w1"])
    wbig = wbig.at[:H, WD_OFF:WD_OFF + H].set(p["wd"])
    wbig = wbig.at[:FF, W2_OFF:W2_OFF + H].set(p["w2"])
    wbig = wbig.astype(jnp.bfloat16)

    return {"word_emb": p["word_emb"], "pos_emb": p["pos_emb"],
            "small": small, "wbig": wbig}


@jax.jit
def model_bce_forward(input_ids, labels, packed):
    # Glue: embedding lookup + additive attention mask from input_ids.ne(1).
    x = packed["word_emb"][input_ids] + packed["pos_emb"][None, :, :]  # (B,S,H)
    x2d = x.reshape(B * S, H).astype(jnp.float32)                      # fused batch
    add_mask = jnp.where(input_ids != PAD_ID, 0.0, -1e9)
    add_mask = add_mask.astype(jnp.float32)[:, None, :]                # (B,1,S)
    labels_f = labels.astype(jnp.float32).reshape(B, 1)                # (B,1)

    def full_spec(a):
        nd = a.ndim
        return pl.BlockSpec(a.shape, lambda i, _nd=nd: (0,) * _nd)

    inputs = (x2d, add_mask, labels_f, packed["small"], packed["wbig"])
    in_specs = [full_spec(a) for a in inputs]
    out_specs = (
        pl.BlockSpec((B, 1), lambda i: (0, 0)),
        pl.BlockSpec((1, 1), lambda i: (0, 0)),
    )

    probs, loss = pl.pallas_call(
        encoder_bce_kernel,
        grid=(1,),  # everything fits comfortably in VMEM at these shapes
        in_specs=in_specs,
        out_specs=out_specs,
        out_shape=(
            jax.ShapeDtypeStruct((B, 1), jnp.float32),
            jax.ShapeDtypeStruct((1, 1), jnp.float32),
        ),
        scratch_shapes=[
            pltpu.VMEM((B, S, 3 * H), jnp.bfloat16),   # fused Q/K/V
            pltpu.VMEM((B, S, H), jnp.float32),        # per-head contexts
        ],
        compiler_params=pltpu.CompilerParams(dimension_semantics=("arbitrary",)),
    )(*inputs)

    # Mirrors the `labels is not None` branch: return (loss, probs).
    return loss[0, 0], probs


if __name__ == "__main__":
    key = jax.random.PRNGKey(0)
    kp, kid, klab = jax.random.split(key, 3)
    params = init_params(kp)
    packed = pack_params(params)

    input_ids = jax.random.randint(kid, (B, S), 0, V, dtype=jnp.int32)
    # force some pad tokens so the attention-mask path (input_ids.ne(1)) is used
    input_ids = input_ids.at[:, -2:].set(PAD_ID)
    labels = jax.random.randint(klab, (B,), 0, 2, dtype=jnp.int32)

    loss, probs = model_bce_forward(input_ids, labels, packed)
    jax.block_until_ready((loss, probs))

    assert probs.shape == (B, 1)
    assert bool(jnp.isfinite(loss)) and bool(jnp.all(jnp.isfinite(probs)))
    assert bool(jnp.all((probs >= 0.0) & (probs <= 1.0)))
    print("KERNEL_OK")
</pallas_src>

<mosaic_0001>
module attributes {stable_mosaic.version = 11 : i64} {
  func.func @encoder_bce_kernel(%arg0: i32, %arg1: memref<16x32xf32, #tpu.memory_space<vmem>>, %arg2: memref<2x1x8xf32, #tpu.memory_space<vmem>>, %arg3: memref<2x1xf32, #tpu.memory_space<vmem>>, %arg4: memref<16x128xf32, #tpu.memory_space<vmem>>, %arg5: memref<64x640xbf16, #tpu.memory_space<vmem>>, %arg6: memref<2x1xf32, #tpu.memory_space<vmem>>, %arg7: memref<1x1xf32, #tpu.memory_space<vmem>>, %arg8: memref<2x8x96xbf16, #tpu.memory_space<vmem>>, %arg9: memref<2x8x32xf32, #tpu.memory_space<vmem>>) attributes {dimension_semantics = [#tpu.dimension_semantics<arbitrary>], iteration_bounds = array<i64: 1>, scalar_prefetch = 0 : i64, scratch_operands = 2 : i64, tpu.core_type = #tpu.core_type<tc>, window_params = [{pipeline_mode = #tpu.pipeline_mode<synchronous>, transform_indices = @transform_0, window_bounds = array<i64: 16, 32>}, {pipeline_mode = #tpu.pipeline_mode<synchronous>, transform_indices = @transform_1, window_bounds = array<i64: 2, 1, 8>}, {pipeline_mode = #tpu.pipeline_mode<synchronous>, transform_indices = @transform_2, window_bounds = array<i64: 2, 1>}, {pipeline_mode = #tpu.pipeline_mode<synchronous>, transform_indices = @transform_3, window_bounds = array<i64: 16, 128>}, {pipeline_mode = #tpu.pipeline_mode<synchronous>, transform_indices = @transform_4, window_bounds = array<i64: 64, 640>}, {pipeline_mode = #tpu.pipeline_mode<synchronous>, transform_indices = @transform_5, window_bounds = array<i64: 2, 1>}, {pipeline_mode = #tpu.pipeline_mode<synchronous>, transform_indices = @transform_6, window_bounds = array<i64: 1, 1>}]} {
    %c0 = arith.constant 0 : index
    %c0_0 = arith.constant 0 : index
    %0 = vector.load %arg4[%c0, %c0_0] : memref<16x128xf32, #tpu.memory_space<vmem>>, vector<1x32xf32>
    %c1 = arith.constant 1 : index
    %c0_1 = arith.constant 0 : index
    %1 = vector.load %arg4[%c1, %c0_1] : memref<16x128xf32, #tpu.memory_space<vmem>>, vector<1x32xf32>
    %c2 = arith.constant 2 : index
    %c0_2 = arith.constant 0 : index
    %2 = vector.load %arg4[%c2, %c0_2] : memref<16x128xf32, #tpu.memory_space<vmem>>, vector<1x96xf32>
    %c3 = arith.constant 3 : index
    %c0_3 = arith.constant 0 : index
    %3 = vector.load %arg4[%c3, %c0_3] : memref<16x128xf32, #tpu.memory_space<vmem>>, vector<1x32xf32>
    %c4 = arith.constant 4 : index
    %c0_4 = arith.constant 0 : index
    %4 = vector.load %arg4[%c4, %c0_4] : memref<16x128xf32, #tpu.memory_space<vmem>>, vector<1x32xf32>
    %c5 = arith.constant 5 : index
    %c0_5 = arith.constant 0 : index
    %5 = vector.load %arg4[%c5, %c0_5] : memref<16x128xf32, #tpu.memory_space<vmem>>, vector<1x32xf32>
    %c6 = arith.constant 6 : index
    %c0_6 = arith.constant 0 : index
    %6 = vector.load %arg4[%c6, %c0_6] : memref<16x128xf32, #tpu.memory_space<vmem>>, vector<1x64xf32>
    %c7 = arith.constant 7 : index
    %c0_7 = arith.constant 0 : index
    %7 = vector.load %arg4[%c7, %c0_7] : memref<16x128xf32, #tpu.memory_space<vmem>>, vector<1x32xf32>
    %c8 = arith.constant 8 : index
    %c0_8 = arith.constant 0 : index
    %8 = vector.load %arg4[%c8, %c0_8] : memref<16x128xf32, #tpu.memory_space<vmem>>, vector<1x32xf32>
    %c9 = arith.constant 9 : index
    %c0_9 = arith.constant 0 : index
    %9 = vector.load %arg4[%c9, %c0_9] : memref<16x128xf32, #tpu.memory_space<vmem>>, vector<1x32xf32>
    %c10 = arith.constant 10 : index
    %c0_10 = arith.constant 0 : index
    %10 = vector.load %arg4[%c10, %c0_10] : memref<16x128xf32, #tpu.memory_space<vmem>>, vector<1x32xf32>
    %c11 = arith.constant 11 : index
    %c0_11 = arith.constant 0 : index
    %11 = vector.load %arg4[%c11, %c0_11] : memref<16x128xf32, #tpu.memory_space<vmem>>, vector<1x32xf32>
    %c12 = arith.constant 12 : index
    %c0_12 = arith.constant 0 : index
    %12 = vector.load %arg4[%c12, %c0_12] : memref<16x128xf32, #tpu.memory_space<vmem>>, vector<1x1xf32>
    %c0_13 = arith.constant 0 : index
    %c0_14 = arith.constant 0 : index
    %13 = vector.load %arg5[%c0_13, %c0_14] : memref<64x640xbf16, #tpu.memory_space<vmem>>, vector<32x96xbf16>
    %c0_15 = arith.constant 0 : index
    %c128 = arith.constant 128 : index
    %14 = vector.load %arg5[%c0_15, %c128] : memref<64x640xbf16, #tpu.memory_space<vmem>>, vector<32x32xbf16>
    %c0_16 = arith.constant 0 : index
    %c256 = arith.constant 256 : index
    %15 = vector.load %arg5[%c0_16, %c256] : memref<64x640xbf16, #tpu.memory_space<vmem>>, vector<32x64xbf16>
    %c0_17 = arith.constant 0 : index
    %c384 = arith.constant 384 : index
    %16 = vector.load %arg5[%c0_17, %c384] : memref<64x640xbf16, #tpu.memory_space<vmem>>, vector<32x32xbf16>
    %c0_18 = arith.constant 0 : index
    %c512 = arith.constant 512 : index
    %17 = vector.load %arg5[%c0_18, %c512] : memref<64x640xbf16, #tpu.memory_space<vmem>>, vector<64x32xbf16>
    %c0_19 = arith.constant 0 : index
    %c0_20 = arith.constant 0 : index
    %18 = vector.load %arg1[%c0_19, %c0_20] : memref<16x32xf32, #tpu.memory_space<vmem>>, vector<16x32xf32>
    %cst = arith.constant dense<0.000000e+00> : vector<16xf32>
    %19 = vector.multi_reduction <add>, %18, %cst [1] : vector<16x32xf32> to vector<16xf32>
    %20 = vector.shape_cast %19 : vector<16xf32> to vector<16x1xf32>
    %cst_21 = arith.constant 3.200000e+01 : f32
    %21 = vector.broadcast %cst_21 : f32 to vector<16x1xf32>
    %22 = arith.divf %20, %21 : vector<16x1xf32>
    %23 = vector.broadcast %22 : vector<16x1xf32> to vector<16x32xf32>
    %24 = arith.subf %18, %23 : vector<16x32xf32>
    %25 = arith.mulf %24, %24 : vector<16x32xf32>
    %cst_22 = arith.constant dense<0.000000e+00> : vector<16xf32>
    %26 = vector.multi_reduction <add>, %25, %cst_22 [1] : vector<16x32xf32> to vector<16xf32>
    %27 = vector.shape_cast %26 : vector<16xf32> to vector<16x1xf32>
    %cst_23 = arith.constant 3.200000e+01 : f32
    %28 = vector.broadcast %cst_23 : f32 to vector<16x1xf32>
    %29 = arith.divf %27, %28 : vector<16x1xf32>
    %30 = vector.broadcast %22 : vector<16x1xf32> to vector<16x32xf32>
    %31 = arith.subf %18, %30 : vector<16x32xf32>
    %cst_24 = arith.constant 9.99999974E-6 : f32
    %32 = vector.broadcast %cst_24 : f32 to vector<16x1xf32>
    %33 = arith.addf %29, %32 : vector<16x1xf32>
    %34 = math.rsqrt %33 : vector<16x1xf32>
    %35 = vector.broadcast %34 : vector<16x1xf32> to vector<16x32xf32>
    %36 = arith.mulf %31, %35 : vector<16x32xf32>
    %37 = vector.broadcast %0 : vector<1x32xf32> to vector<16x32xf32>
    %38 = arith.mulf %36, %37 : vector<16x32xf32>
    %39 = vector.broadcast %1 : vector<1x32xf32> to vector<16x32xf32>
    %40 = arith.addf %38, %39 : vector<16x32xf32>
    %41 = arith.truncf %40 : vector<16x32xf32> to vector<16x32xbf16>
    %cst_25 = arith.constant dense<0.000000e+00> : vector<16x96xf32>
    %42 = tpu.matmul %41, %13, %cst_25 {dimension_numbers = #tpu.dot_dimension_numbers<[1], [0], [0], [1], [0, 0, 1, 1], [], []>} : vector<16x32xbf16>, vector<32x96xbf16>, vector<16x96xf32> -> vector<16x96xf32>
    %43 = vector.broadcast %2 : vector<1x96xf32> to vector<16x96xf32>
    %44 = arith.addf %42, %43 : vector<16x96xf32>
    %45 = vector.shape_cast %44 : vector<16x96xf32> to vector<2x8x96xf32>
    %46 = arith.truncf %45 : vector<2x8x96xf32> to vector<2x8x96xbf16>
    %c0_26 = arith.constant 0 : index
    %c0_27 = arith.constant 0 : index
    %c0_28 = arith.constant 0 : index
    %47 = vector.load %arg8[%c0_26, %c0_27, %c0_28] : memref<2x8x96xbf16, #tpu.memory_space<vmem>>, vector<2x8x96xbf16>
    tpu.vector_store %arg8[%c0_26, %c0_27, %c0_28], %46 {strides = array<i32>} : memref<2x8x96xbf16, #tpu.memory_space<vmem>>, vector<2x8x96xbf16>,
    %c0_29 = arith.constant 0 : index
    %c0_30 = arith.constant 0 : index
    %c0_31 = arith.constant 0 : index
    %48 = vector.load %arg2[%c0_29, %c0_30, %c0_31] : memref<2x1x8xf32, #tpu.memory_space<vmem>>, vector<2x1x8xf32>
    %49 = vector.shape_cast %48 : vector<2x1x8xf32> to vector<2x1x8xf32>
    %50 = vector.broadcast %49 : vector<2x1x8xf32> to vector<2x8x8xf32>
    %c0_32 = arith.constant 0 : index
    %c0_33 = arith.constant 0 : index
    %c0_34 = arith.constant 0 : index
    %51 = vector.load %arg8[%c0_32, %c0_33, %c0_34] : memref<2x8x96xbf16, #tpu.memory_space<vmem>>, vector<2x8x8xbf16>
    %c0_35 = arith.constant 0 : index
    %c0_36 = arith.constant 0 : index
    %c32 = arith.constant 32 : index
    %52 = vector.load %arg8[%c0_35, %c0_36, %c32] : memref<2x8x96xbf16, #tpu.memory_space<vmem>>, vector<2x8x8xbf16>
    %c0_37 = arith.constant 0 : index
    %c0_38 = arith.constant 0 : index
    %c64 = arith.constant 64 : index
    %53 = vector.load %arg8[%c0_37, %c0_38, %c64] : memref<2x8x96xbf16, #tpu.memory_space<vmem>>, vector<2x8x8xbf16>
    "tpu.trace_start"() <{level = 10 : i32, message = "bqd,bkd->bqk"}> : () -> ()
    %cst_39 = arith.constant dense<0.000000e+00> : vector<2x8x8xf32>
    %54 = tpu.matmul %51, %52, %cst_39 {dimension_numbers = #tpu.dot_dimension_numbers<[2], [2], [1], [1], [0, 0, 0, 1, 1, 1], [0], [0]>} : vector<2x8x8xbf16>, vector<2x8x8xbf16>, vector<2x8x8xf32> -> vector<2x8x8xf32>
    "tpu.trace_stop"() : () -> ()
    %cst_40 = arith.constant 0.353553385 : f32
    %55 = vector.broadcast %cst_40 : f32 to vector<2x8x8xf32>
    %56 = arith.mulf %54, %55 : vector<2x8x8xf32>
    %57 = arith.addf %56, %50 : vector<2x8x8xf32>
    %cst_41 = arith.constant dense<0xFF800000> : vector<2x8xf32>
    %58 = vector.multi_reduction <maximumf>, %57, %cst_41 [2] : vector<2x8x8xf32> to vector<2x8xf32>
    %59 = vector.shape_cast %58 : vector<2x8xf32> to vector<2x8x1xf32>
    %60 = vector.broadcast %59 : vector<2x8x1xf32> to vector<2x8x8xf32>
    %61 = arith.subf %57, %60 : vector<2x8x8xf32>
    %62 = math.exp %61 : vector<2x8x8xf32>
    %cst_42 = arith.constant dense<0.000000e+00> : vector<2x8xf32>
    %63 = vector.multi_reduction <add>, %62, %cst_42 [2] : vector<2x8x8xf32> to vector<2x8xf32>
    %64 = vector.shape_cast %63 : vector<2x8xf32> to vector<2x8x1xf32>
    %65 = tpu.reciprocal %64 {approx = true} : vector<2x8x1xf32> -> vector<2x8x1xf32>
    %66 = vector.broadcast %65 : vector<2x8x1xf32> to vector<2x8x8xf32>
    %67 = arith.mulf %62, %66 : vector<2x8x8xf32>
    %68 = arith.truncf %67 : vector<2x8x8xf32> to vector<2x8x8xbf16>
    "tpu.trace_start"() <{level = 10 : i32, message = "bqk,bkd->bqd"}> : () -> ()
    %cst_43 = arith.constant dense<0.000000e+00> : vector<2x8x8xf32>
    %69 = tpu.matmul %68, %53, %cst_43 {dimension_numbers = #tpu.dot_dimension_numbers<[2], [1], [1], [2], [0, 0, 0, 1, 1, 2], [0], [0]>} : vector<2x8x8xbf16>, vector<2x8x8xbf16>, vector<2x8x8xf32> -> vector<2x8x8xf32>
    "tpu.trace_stop"() : () -> ()
    %c0_44 = arith.constant 0 : index
    %c0_45 = arith.constant 0 : index
    %c0_46 = arith.constant 0 : index
    %70 = vector.load %arg9[%c0_44, %c0_45, %c0_46] : memref<2x8x32xf32, #tpu.memory_space<vmem>>, vector<2x8x8xf32>
    tpu.vector_store %arg9[%c0_44, %c0_45, %c0_46], %69 {strides = array<i32>} : memref<2x8x32xf32, #tpu.memory_space<vmem>>, vector<2x8x8xf32>,
    %c0_47 = arith.constant 0 : index
    %c0_48 = arith.constant 0 : index
    %c8_49 = arith.constant 8 : index
    %71 = vector.load %arg8[%c0_47, %c0_48, %c8_49] : memref<2x8x96xbf16, #tpu.memory_space<vmem>>, vector<2x8x8xbf16>
    %c0_50 = arith.constant 0 : index
    %c0_51 = arith.constant 0 : index
    %c40 = arith.constant 40 : index
    %72 = vector.load %arg8[%c0_50, %c0_51, %c40] : memref<2x8x96xbf16, #tpu.memory_space<vmem>>, vector<2x8x8xbf16>
    %c0_52 = arith.constant 0 : index
    %c0_53 = arith.constant 0 : index
    %c72 = arith.constant 72 : index
    %73 = vector.load %arg8[%c0_52, %c0_53, %c72] : memref<2x8x96xbf16, #tpu.memory_space<vmem>>, vector<2x8x8xbf16>
    "tpu.trace_start"() <{level = 10 : i32, message = "bqd,bkd->bqk"}> : () -> ()
    %cst_54 = arith.constant dense<0.000000e+00> : vector<2x8x8xf32>
    %74 = tpu.matmul %71, %72, %cst_54 {dimension_numbers = #tpu.dot_dimension_numbers<[2], [2], [1], [1], [0, 0, 0, 1, 1, 1], [0], [0]>} : vector<2x8x8xbf16>, vector<2x8x8xbf16>, vector<2x8x8xf32> -> vector<2x8x8xf32>
    "tpu.trace_stop"() : () -> ()
    %cst_55 = arith.constant 0.353553385 : f32
    %75 = vector.broadcast %cst_55 : f32 to vector<2x8x8xf32>
    %76 = arith.mulf %74, %75 : vector<2x8x8xf32>
    %77 = arith.addf %76, %50 : vector<2x8x8xf32>
    %cst_56 = arith.constant dense<0xFF800000> : vector<2x8xf32>
    %78 = vector.multi_reduction <maximumf>, %77, %cst_56 [2] : vector<2x8x8xf32> to vector<2x8xf32>
    %79 = vector.shape_cast %78 : vector<2x8xf32> to vector<2x8x1xf32>
    %80 = vector.broadcast %79 : vector<2x8x1xf32> to vector<2x8x8xf32>
    %81 = arith.subf %77, %80 : vector<2x8x8xf32>
    %82 = math.exp %81 : vector<2x8x8xf32>
    %cst_57 = arith.constant dense<0.000000e+00> : vector<2x8xf32>
    %83 = vector.multi_reduction <add>, %82, %cst_57 [2] : vector<2x8x8xf32> to vector<2x8xf32>
    %84 = vector.shape_cast %83 : vector<2x8xf32> to vector<2x8x1xf32>
    %85 = tpu.reciprocal %84 {approx = true} : vector<2x8x1xf32> -> vector<2x8x1xf32>
    %86 = vector.broadcast %85 : vector<2x8x1xf32> to vector<2x8x8xf32>
    %87 = arith.mulf %82, %86 : vector<2x8x8xf32>
    %88 = arith.truncf %87 : vector<2x8x8xf32> to vector<2x8x8xbf16>
    "tpu.trace_start"() <{level = 10 : i32, message = "bqk,bkd->bqd"}> : () -> ()
    %cst_58 = arith.constant dense<0.000000e+00> : vector<2x8x8xf32>
    %89 = tpu.matmul %88, %73, %cst_58 {dimension_numbers = #tpu.dot_dimension_numbers<[2], [1], [1], [2], [0, 0, 0, 1, 1, 2], [0], [0]>} : vector<2x8x8xbf16>, vector<2x8x8xbf16>, vector<2x8x8xf32> -> vector<2x8x8xf32>
    "tpu.trace_stop"() : () -> ()
    %c0_59 = arith.constant 0 : index
    %c0_60 = arith.constant 0 : index
    %c8_61 = arith.constant 8 : index
    %90 = vector.load %arg9[%c0_59, %c0_60, %c8_61] : memref<2x8x32xf32, #tpu.memory_space<vmem>>, vector<2x8x8xf32>
    tpu.vector_store %arg9[%c0_59, %c0_60, %c8_61], %89 {strides = array<i32>} : memref<2x8x32xf32, #tpu.memory_space<vmem>>, vector<2x8x8xf32>,
    %c0_62 = arith.constant 0 : index
    %c0_63 = arith.constant 0 : index
    %c16 = arith.constant 16 : index
    %91 = vector.load %arg8[%c0_62, %c0_63, %c16] : memref<2x8x96xbf16, #tpu.memory_space<vmem>>, vector<2x8x8xbf16>
    %c0_64 = arith.constant 0 : index
    %c0_65 = arith.constant 0 : index
    %c48 = arith.constant 48 : index
    %92 = vector.load %arg8[%c0_64, %c0_65, %c48] : memref<2x8x96xbf16, #tpu.memory_space<vmem>>, vector<2x8x8xbf16>
    %c0_66 = arith.constant 0 : index
    %c0_67 = arith.constant 0 : index
    %c80 = arith.constant 80 : index
    %93 = vector.load %arg8[%c0_66, %c0_67, %c80] : memref<2x8x96xbf16, #tpu.memory_space<vmem>>, vector<2x8x8xbf16>
    "tpu.trace_start"() <{level = 10 : i32, message = "bqd,bkd->bqk"}> : () -> ()
    %cst_68 = arith.constant dense<0.000000e+00> : vector<2x8x8xf32>
    %94 = tpu.matmul %91, %92, %cst_68 {dimension_numbers = #tpu.dot_dimension_numbers<[2], [2], [1], [1], [0, 0, 0, 1, 1, 1], [0], [0]>} : vector<2x8x8xbf16>, vector<2x8x8xbf16>, vector<2x8x8xf32> -> vector<2x8x8xf32>
    "tpu.trace_stop"() : () -> ()
    %cst_69 = arith.constant 0.353553385 : f32
    %95 = vector.broadcast %cst_69 : f32 to vector<2x8x8xf32>
    %96 = arith.mulf %94, %95 : vector<2x8x8xf32>
    %97 = arith.addf %96, %50 : vector<2x8x8xf32>
    %cst_70 = arith.constant dense<0xFF800000> : vector<2x8xf32>
    %98 = vector.multi_reduction <maximumf>, %97, %cst_70 [2] : vector<2x8x8xf32> to vector<2x8xf32>
    %99 = vector.shape_cast %98 : vector<2x8xf32> to vector<2x8x1xf32>
    %100 = vector.broadcast %99 : vector<2x8x1xf32> to vector<2x8x8xf32>
    %101 = arith.subf %97, %100 : vector<2x8x8xf32>
    %102 = math.exp %101 : vector<2x8x8xf32>
    %cst_71 = arith.constant dense<0.000000e+00> : vector<2x8xf32>
    %103 = vector.multi_reduction <add>, %102, %cst_71 [2] : vector<2x8x8xf32> to vector<2x8xf32>
    %104 = vector.shape_cast %103 : vector<2x8xf32> to vector<2x8x1xf32>
    %105 = tpu.reciprocal %104 {approx = true} : vector<2x8x1xf32> -> vector<2x8x1xf32>
    %106 = vector.broadcast %105 : vector<2x8x1xf32> to vector<2x8x8xf32>
    %107 = arith.mulf %102, %106 : vector<2x8x8xf32>
    %108 = arith.truncf %107 : vector<2x8x8xf32> to vector<2x8x8xbf16>
    "tpu.trace_start"() <{level = 10 : i32, message = "bqk,bkd->bqd"}> : () -> ()
    %cst_72 = arith.constant dense<0.000000e+00> : vector<2x8x8xf32>
    %109 = tpu.matmul %108, %93, %cst_72 {dimension_numbers = #tpu.dot_dimension_numbers<[2], [1], [1], [2], [0, 0, 0, 1, 1, 2], [0], [0]>} : vector<2x8x8xbf16>, vector<2x8x8xbf16>, vector<2x8x8xf32> -> vector<2x8x8xf32>
    "tpu.trace_stop"() : () -> ()
    %c0_73 = arith.constant 0 : index
    %c0_74 = arith.constant 0 : index
    %c16_75 = arith.constant 16 : index
    %110 = vector.load %arg9[%c0_73, %c0_74, %c16_75] : memref<2x8x32xf32, #tpu.memory_space<vmem>>, vector<2x8x8xf32>
    tpu.vector_store %arg9[%c0_73, %c0_74, %c16_75], %109 {strides = array<i32>} : memref<2x8x32xf32, #tpu.memory_space<vmem>>, vector<2x8x8xf32>,
    %c0_76 = arith.constant 0 : index
    %c0_77 = arith.constant 0 : index
    %c24 = arith.constant 24 : index
    %111 = vector.load %arg8[%c0_76, %c0_77, %c24] : memref<2x8x96xbf16, #tpu.memory_space<vmem>>, vector<2x8x8xbf16>
    %c0_78 = arith.constant 0 : index
    %c0_79 = arith.constant 0 : index
    %c56 = arith.constant 56 : index
    %112 = vector.load %arg8[%c0_78, %c0_79, %c56] : memref<2x8x96xbf16, #tpu.memory_space<vmem>>, vector<2x8x8xbf16>
    %c0_80 = arith.constant 0 : index
    %c0_81 = arith.constant 0 : index
    %c88 = arith.constant 88 : index
    %113 = vector.load %arg8[%c0_80, %c0_81, %c88] : memref<2x8x96xbf16, #tpu.memory_space<vmem>>, vector<2x8x8xbf16>
    "tpu.trace_start"() <{level = 10 : i32, message = "bqd,bkd->bqk"}> : () -> ()
    %cst_82 = arith.constant dense<0.000000e+00> : vector<2x8x8xf32>
    %114 = tpu.matmul %111, %112, %cst_82 {dimension_numbers = #tpu.dot_dimension_numbers<[2], [2], [1], [1], [0, 0, 0, 1, 1, 1], [0], [0]>} : vector<2x8x8xbf16>, vector<2x8x8xbf16>, vector<2x8x8xf32> -> vector<2x8x8xf32>
    "tpu.trace_stop"() : () -> ()
    %cst_83 = arith.constant 0.353553385 : f32
    %115 = vector.broadcast %cst_83 : f32 to vector<2x8x8xf32>
    %116 = arith.mulf %114, %115 : vector<2x8x8xf32>
    %117 = arith.addf %116, %50 : vector<2x8x8xf32>
    %cst_84 = arith.constant dense<0xFF800000> : vector<2x8xf32>
    %118 = vector.multi_reduction <maximumf>, %117, %cst_84 [2] : vector<2x8x8xf32> to vector<2x8xf32>
    %119 = vector.shape_cast %118 : vector<2x8xf32> to vector<2x8x1xf32>
    %120 = vector.broadcast %119 : vector<2x8x1xf32> to vector<2x8x8xf32>
    %121 = arith.subf %117, %120 : vector<2x8x8xf32>
    %122 = math.exp %121 : vector<2x8x8xf32>
    %cst_85 = arith.constant dense<0.000000e+00> : vector<2x8xf32>
    %123 = vector.multi_reduction <add>, %122, %cst_85 [2] : vector<2x8x8xf32> to vector<2x8xf32>
    %124 = vector.shape_cast %123 : vector<2x8xf32> to vector<2x8x1xf32>
    %125 = tpu.reciprocal %124 {approx = true} : vector<2x8x1xf32> -> vector<2x8x1xf32>
    %126 = vector.broadcast %125 : vector<2x8x1xf32> to vector<2x8x8xf32>
    %127 = arith.mulf %122, %126 : vector<2x8x8xf32>
    %128 = arith.truncf %127 : vector<2x8x8xf32> to vector<2x8x8xbf16>
    "tpu.trace_start"() <{level = 10 : i32, message = "bqk,bkd->bqd"}> : () -> ()
    %cst_86 = arith.constant dense<0.000000e+00> : vector<2x8x8xf32>
    %129 = tpu.matmul %128, %113, %cst_86 {dimension_numbers = #tpu.dot_dimension_numbers<[2], [1], [1], [2], [0, 0, 0, 1, 1, 2], [0], [0]>} : vector<2x8x8xbf16>, vector<2x8x8xbf16>, vector<2x8x8xf32> -> vector<2x8x8xf32>
    "tpu.trace_stop"() : () -> ()
    %c0_87 = arith.constant 0 : index
    %c0_88 = arith.constant 0 : index
    %c24_89 = arith.constant 24 : index
    %130 = vector.load %arg9[%c0_87, %c0_88, %c24_89] : memref<2x8x32xf32, #tpu.memory_space<vmem>>, vector<2x8x8xf32>
    tpu.vector_store %arg9[%c0_87, %c0_88, %c24_89], %129 {strides = array<i32>} : memref<2x8x32xf32, #tpu.memory_space<vmem>>, vector<2x8x8xf32>,
    %c0_90 = arith.constant 0 : index
    %c0_91 = arith.constant 0 : index
    %c0_92 = arith.constant 0 : index
    %131 = vector.load %arg9[%c0_90, %c0_91, %c0_92] : memref<2x8x32xf32, #tpu.memory_space<vmem>>, vector<2x8x32xf32>
    %132 = vector.shape_cast %131 : vector<2x8x32xf32> to vector<16x32xf32>
    %133 = arith.truncf %132 : vector<16x32xf32> to vector<16x32xbf16>
    %cst_93 = arith.constant dense<0.000000e+00> : vector<16x32xf32>
    %134 = tpu.matmul %133, %14, %cst_93 {dimension_numbers = #tpu.dot_dimension_numbers<[1], [0], [0], [1], [0, 0, 1, 1], [], []>} : vector<16x32xbf16>, vector<32x32xbf16>, vector<16x32xf32> -> vector<16x32xf32>
    %135 = vector.broadcast %3 : vector<1x32xf32> to vector<16x32xf32>
    %136 = arith.addf %134, %135 : vector<16x32xf32>
    %137 = arith.addf %40, %136 : vector<16x32xf32>
    %cst_94 = arith.constant dense<0.000000e+00> : vector<16xf32>
    %138 = vector.multi_reduction <add>, %137, %cst_94 [1] : vector<16x32xf32> to vector<16xf32>
    %139 = vector.shape_cast %138 : vector<16xf32> to vector<16x1xf32>
    %cst_95 = arith.constant 3.200000e+01 : f32
    %140 = vector.broadcast %cst_95 : f32 to vector<16x1xf32>
    %141 = arith.divf %139, %140 : vector<16x1xf32>
    %142 = vector.broadcast %141 : vector<16x1xf32> to vector<16x32xf32>
    %143 = arith.subf %137, %142 : vector<16x32xf32>
    %144 = arith.mulf %143, %143 : vector<16x32xf32>
    %cst_96 = arith.constant dense<0.000000e+00> : vector<16xf32>
    %145 = vector.multi_reduction <add>, %144, %cst_96 [1] : vector<16x32xf32> to vector<16xf32>
    %146 = vector.shape_cast %145 : vector<16xf32> to vector<16x1xf32>
    %cst_97 = arith.constant 3.200000e+01 : f32
    %147 = vector.broadcast %cst_97 : f32 to vector<16x1xf32>
    %148 = arith.divf %146, %147 : vector<16x1xf32>
    %149 = vector.broadcast %141 : vector<16x1xf32> to vector<16x32xf32>
    %150 = arith.subf %137, %149 : vector<16x32xf32>
    %cst_98 = arith.constant 9.99999974E-6 : f32
    %151 = vector.broadcast %cst_98 : f32 to vector<16x1xf32>
    %152 = arith.addf %148, %151 : vector<16x1xf32>
    %153 = math.rsqrt %152 : vector<16x1xf32>
    %154 = vector.broadcast %153 : vector<16x1xf32> to vector<16x32xf32>
    %155 = arith.mulf %150, %154 : vector<16x32xf32>
    %156 = vector.broadcast %4 : vector<1x32xf32> to vector<16x32xf32>
    %157 = arith.mulf %155, %156 : vector<16x32xf32>
    %158 = vector.broadcast %5 : vector<1x32xf32> to vector<16x32xf32>
    %159 = arith.addf %157, %158 : vector<16x32xf32>
    %160 = arith.truncf %159 : vector<16x32xf32> to vector<16x32xbf16>
    %cst_99 = arith.constant dense<0.000000e+00> : vector<16x64xf32>
    %161 = tpu.matmul %160, %15, %cst_99 {dimension_numbers = #tpu.dot_dimension_numbers<[1], [0], [0], [1], [0, 0, 1, 1], [], []>} : vector<16x32xbf16>, vector<32x64xbf16>, vector<16x64xf32> -> vector<16x64xf32>
    %162 = vector.broadcast %6 : vector<1x64xf32> to vector<16x64xf32>
    %163 = arith.addf %161, %162 : vector<16x64xf32>
    %164 = arith.mulf %163, %163 : vector<16x64xf32>
    %165 = arith.mulf %163, %164 : vector<16x64xf32>
    %cst_100 = arith.constant 4.471500e-02 : f32
    %166 = vector.broadcast %cst_100 : f32 to vector<16x64xf32>
    %167 = arith.mulf %166, %165 : vector<16x64xf32>
    %168 = arith.addf %163, %167 : vector<16x64xf32>
    %cst_101 = arith.constant 0.797884583 : f32
    %169 = vector.broadcast %cst_101 : f32 to vector<16x64xf32>
    %170 = arith.mulf %169, %168 : vector<16x64xf32>
    %171 = math.tanh %170 : vector<16x64xf32>
    %cst_102 = arith.constant 1.000000e+00 : f32
    %172 = vector.broadcast %cst_102 : f32 to vector<16x64xf32>
    %173 = arith.addf %172, %171 : vector<16x64xf32>
    %cst_103 = arith.constant 5.000000e-01 : f32
    %174 = vector.broadcast %cst_103 : f32 to vector<16x64xf32>
    %175 = arith.mulf %174, %173 : vector<16x64xf32>
    %176 = arith.mulf %163, %175 : vector<16x64xf32>
    %177 = arith.truncf %176 : vector<16x64xf32> to vector<16x64xbf16>
    %cst_104 = arith.constant dense<0.000000e+00> : vector<16x32xf32>
    %178 = tpu.matmul %177, %17, %cst_104 {dimension_numbers = #tpu.dot_dimension_numbers<[1], [0], [0], [1], [0, 0, 1, 1], [], []>} : vector<16x64xbf16>, vector<64x32xbf16>, vector<16x32xf32> -> vector<16x32xf32>
    %179 = vector.broadcast %7 : vector<1x32xf32> to vector<16x32xf32>
    %180 = arith.addf %178, %179 : vector<16x32xf32>
    %181 = arith.addf %159, %180 : vector<16x32xf32>
    %cst_105 = arith.constant dense<0.000000e+00> : vector<16xf32>
    %182 = vector.multi_reduction <add>, %181, %cst_105 [1] : vector<16x32xf32> to vector<16xf32>
    %183 = vector.shape_cast %182 : vector<16xf32> to vector<16x1xf32>
    %cst_106 = arith.constant 3.200000e+01 : f32
    %184 = vector.broadcast %cst_106 : f32 to vector<16x1xf32>
    %185 = arith.divf %183, %184 : vector<16x1xf32>
    %186 = vector.broadcast %185 : vector<16x1xf32> to vector<16x32xf32>
    %187 = arith.subf %181, %186 : vector<16x32xf32>
    %188 = arith.mulf %187, %187 : vector<16x32xf32>
    %cst_107 = arith.constant dense<0.000000e+00> : vector<16xf32>
    %189 = vector.multi_reduction <add>, %188, %cst_107 [1] : vector<16x32xf32> to vector<16xf32>
    %190 = vector.shape_cast %189 : vector<16xf32> to vector<16x1xf32>
    %cst_108 = arith.constant 3.200000e+01 : f32
    %191 = vector.broadcast %cst_108 : f32 to vector<16x1xf32>
    %192 = arith.divf %190, %191 : vector<16x1xf32>
    %193 = vector.broadcast %185 : vector<16x1xf32> to vector<16x32xf32>
    %194 = arith.subf %181, %193 : vector<16x32xf32>
    %cst_109 = arith.constant 9.99999974E-6 : f32
    %195 = vector.broadcast %cst_109 : f32 to vector<16x1xf32>
    %196 = arith.addf %192, %195 : vector<16x1xf32>
    %197 = math.rsqrt %196 : vector<16x1xf32>
    %198 = vector.broadcast %197 : vector<16x1xf32> to vector<16x32xf32>
    %199 = arith.mulf %194, %198 : vector<16x32xf32>
    %200 = vector.broadcast %8 : vector<1x32xf32> to vector<16x32xf32>
    %201 = arith.mulf %199, %200 : vector<16x32xf32>
    %202 = vector.broadcast %9 : vector<1x32xf32> to vector<16x32xf32>
    %203 = arith.addf %201, %202 : vector<16x32xf32>
    %204 = vector.shape_cast %203 : vector<16x32xf32> to vector<2x8x32xf32>
    %205 = vector.extract_strided_slice %204 {offsets = [0, 0, 0], sizes = [2, 1, 32], strides = [1, 1, 1]} : vector<2x8x32xf32> to vector<2x1x32xf32>
    %206 = vector.shape_cast %205 : vector<2x1x32xf32> to vector<2x32xf32>
    %207 = arith.truncf %206 : vector<2x32xf32> to vector<2x32xbf16>
    %cst_110 = arith.constant dense<0.000000e+00> : vector<2x32xf32>
    %208 = tpu.matmul %207, %16, %cst_110 {dimension_numbers = #tpu.dot_dimension_numbers<[1], [0], [0], [1], [0, 0, 1, 1], [], []>} : vector<2x32xbf16>, vector<32x32xbf16>, vector<2x32xf32> -> vector<2x32xf32>
    %209 = vector.broadcast %10 : vector<1x32xf32> to vector<2x32xf32>
    %210 = arith.addf %208, %209 : vector<2x32xf32>
    %211 = math.tanh %210 : vector<2x32xf32>
    %212 = vector.broadcast %11 : vector<1x32xf32> to vector<2x32xf32>
    %213 = arith.mulf %211, %212 : vector<2x32xf32>
    %cst_111 = arith.constant dense<0.000000e+00> : vector<2xf32>
    %214 = vector.multi_reduction <add>, %213, %cst_111 [1] : vector<2x32xf32> to vector<2xf32>
    %215 = vector.shape_cast %214 : vector<2xf32> to vector<2x1xf32>
    %216 = vector.broadcast %12 : vector<1x1xf32> to vector<2x1xf32>
    %217 = arith.addf %215, %216 : vector<2x1xf32>
    %218 = arith.negf %217 : vector<2x1xf32>
    %219 = math.exp %218 : vector<2x1xf32>
    %cst_112 = arith.constant 1.000000e+00 : f32
    %220 = vector.broadcast %cst_112 : f32 to vector<2x1xf32>
    %221 = arith.addf %220, %219 : vector<2x1xf32>
    %222 = arith.divf %220, %221 : vector<2x1xf32>
    %c0_113 = arith.constant 0 : index
    %c0_114 = arith.constant 0 : index
    %223 = vector.load %arg6[%c0_113, %c0_114] : memref<2x1xf32, #tpu.memory_space<vmem>>, vector<2x1xf32>
    tpu.vector_store %arg6[%c0_113, %c0_114], %222 {strides = array<i32>} : memref<2x1xf32, #tpu.memory_space<vmem>>, vector<2x1xf32>,
    %c0_115 = arith.constant 0 : index
    %c0_116 = arith.constant 0 : index
    %224 = vector.load %arg3[%c0_115, %c0_116] : memref<2x1xf32, #tpu.memory_space<vmem>>, vector<2x1xf32>
    %cst_117 = arith.constant 0.000000e+00 : f32
    %225 = vector.broadcast %cst_117 : f32 to vector<2x1xf32>
    %226 = arith.maximumf %217, %225 : vector<2x1xf32>
    %227 = arith.mulf %217, %224 : vector<2x1xf32>
    %228 = arith.subf %226, %227 : vector<2x1xf32>
    %229 = math.absf %217 : vector<2x1xf32>
    %cst_118 = arith.constant 0.000000e+00 : f32
    %230 = vector.broadcast %cst_118 : f32 to vector<2x1xf32>
    %231 = arith.subf %230, %229 : vector<2x1xf32>
    %232 = math.exp %231 : vector<2x1xf32>
    %cst_119 = arith.constant 1.000000e+00 : f32
    %233 = vector.broadcast %cst_119 : f32 to vector<2x1xf32>
    %234 = arith.addf %233, %232 : vector<2x1xf32>
    %235 = math.log %234 : vector<2x1xf32>
    %236 = arith.addf %228, %235 : vector<2x1xf32>
    %237 = vector.shape_cast %236 : vector<2x1xf32> to vector<1x2x1xf32>
    %cst_120 = arith.constant dense<0.000000e+00> : vector<1xf32>
    %238 = vector.multi_reduction <add>, %237, %cst_120 [1, 2] : vector<1x2x1xf32> to vector<1xf32>
    %239 = vector.shape_cast %238 : vector<1xf32> to vector<1x1x1xf32>
    %240 = vector.extract %239[0, 0, 0] : f32 from vector<1x1x1xf32>
    %241 = vector.broadcast %240 : f32 to vector<1x1xf32>
    %cst_121 = arith.constant 2.000000e+00 : f32
    %242 = vector.broadcast %cst_121 : f32 to vector<1x1xf32>
    %243 = arith.divf %241, %242 : vector<1x1xf32>
    %c0_122 = arith.constant 0 : index
    %c0_123 = arith.constant 0 : index
    %244 = vector.load %arg7[%c0_122, %c0_123] : memref<1x1xf32, #tpu.memory_space<vmem>>, vector<1x1xf32>
    tpu.vector_store %arg7[%c0_122, %c0_123], %243 {strides = array<i32>} : memref<1x1xf32, #tpu.memory_space<vmem>>, vector<1x1xf32>,
    return
  }
  func.func @transform_0(%arg0: i32) -> (i32, i32) {
    %c0_i32 = arith.constant 0 : i32
    %c0_i32_0 = arith.constant 0 : i32
    %c0_i32_1 = arith.constant 0 : i32
    return %c0_i32, %c0_i32_0 : i32, i32
  }
  func.func @transform_1(%arg0: i32) -> (i32, i32, i32) {
    %c0_i32 = arith.constant 0 : i32
    %c0_i32_0 = arith.constant 0 : i32
    %c0_i32_1 = arith.constant 0 : i32
    %c0_i32_2 = arith.constant 0 : i32
    return %c0_i32, %c0_i32_0, %c0_i32_1 : i32, i32, i32
  }
  func.func @transform_2(%arg0: i32) -> (i32, i32) {
    %c0_i32 = arith.constant 0 : i32
    %c0_i32_0 = arith.constant 0 : i32
    %c0_i32_1 = arith.constant 0 : i32
    return %c0_i32, %c0_i32_0 : i32, i32
  }
  func.func @transform_3(%arg0: i32) -> (i32, i32) {
    %c0_i32 = arith.constant 0 : i32
    %c0_i32_0 = arith.constant 0 : i32
    %c0_i32_1 = arith.constant 0 : i32
    return %c0_i32, %c0_i32_0 : i32, i32
  }
  func.func @transform_4(%arg0: i32) -> (i32, i32) {
    %c0_i32 = arith.constant 0 : i32
    %c0_i32_0 = arith.constant 0 : i32
    %c0_i32_1 = arith.constant 0 : i32
    return %c0_i32, %c0_i32_0 : i32, i32
  }
  func.func @transform_5(%arg0: i32) -> (i32, i32) {
    %c0_i32 = arith.constant 0 : i32
    %c0_i32_0 = arith.constant 0 : i32
    %c0_i32_1 = arith.constant 0 : i32
    return %c0_i32, %c0_i32_0 : i32, i32
  }
  func.func @transform_6(%arg0: i32) -> (i32, i32) {
    %c0_i32 = arith.constant 0 : i32
    %c0_i32_0 = arith.constant 0 : i32
    %c0_i32_1 = arith.constant 0 : i32
    return %c0_i32, %c0_i32_0 : i32, i32
  }
}

</mosaic_0001>

<llo_original>
// kernel: model_bce_forward.1
$region0: #{model_bce_forward.1}
  #allocation0 [shape = 'u32[]', space=smem, size = 0x4, offset = 0x4, fixed_abs, tag = 'smem constant byte address 0x4 - core index']
  #allocation1 [shape = 'u32[72,128]{1,0:T(1,128)}', space=vmem, size = 0x9000, scoped, tag = 'internal scratch']
  #allocation2 [shape = 'bf16[2,8,96]{2,1,0:T(8,128)(2,1)}', space=vmem, size = 0x1000, scoped, tag = 'scratch operand']
  #allocation3 [shape = 'f32[2,8,32]{2,1,0:T(8,128)}', space=vmem, size = 0x2000, scoped, tag = 'scratch operand']
  %s0 = inlined_call_operand.vmem [shape: f32[16,32], index: 0, kind: input, shape index: {}]
  %s1 = inlined_call_operand.vmem [shape: f32[2,1,8], index: 1, kind: input, shape index: {}]
  %s2 = inlined_call_operand.vmem [shape: f32[2,1], index: 2, kind: input, shape index: {}]
  %s3 = inlined_call_operand.vmem [shape: f32[16,128], index: 3, kind: input, shape index: {}]
  %s4 = inlined_call_operand.vmem [shape: bf16[64,640], index: 4, kind: input, shape index: {}]
  %s5 = inlined_call_operand.vmem [shape: f32[2,1], index: 5, kind: output, shape index: {0}]
  %s6 = inlined_call_operand.hbm [shape: f32[1,1], index: 6, kind: output, shape index: {1}]
  %7 = xla_tuple %s5, %s6
  %s8 = sld [smem:[#allocation0]]
  $region38: #{model_bce_forward.1} parent=0
    _
  %s10 = ssub.s32 1, %s8
  %s11 = scalar_select 0, %s10, %s8
  $region1: #{model_bce_forward.1} parent=0
    #allocation4 [shape = 'u8[512]{0}', space=vmem, size = 0x400, scoped, tag = 'output window, operand 1, single buffered']
    #allocation5 [shape = 's32[1]{0}', space=sflag, size = 0x4, scoped, tag = 'scoped memory for model_bce_forward.1']
    %12 = vsyncpa [#allocation5], 0
    // Predicated region
    $region2: #{model_bce_forward.1} parent=1 // pred_check
      _
    $region3: #{model_bce_forward.1} parent=1 // pred_check_branch
      %14 = sbr.rel (0) target = $region5
    $region4: #{model_bce_forward.1} parent=1 // pred_region
      _
    $region5: #{model_bce_forward.1} parent=1 // pred_fallthru
      _
    // Predicated region
    $region6: #{model_bce_forward.1} parent=1 // pred_check
      _
    $region7: #{model_bce_forward.1} parent=1 // pred_check_branch
      %16 = sbr.rel (0) target = $region9
    $region8: #{model_bce_forward.1} parent=1 // pred_region
      _
    $region9: #{model_bce_forward.1} parent=1 // pred_fallthru
      _
    // Predicated region
    $region10: #{model_bce_forward.1} parent=1 // pred_check
      _
    $region11: #{model_bce_forward.1} parent=1 // pred_check_branch
      %18 = sbr.rel (0) target = $region13
    $region12: #{model_bce_forward.1} parent=1 // pred_region
      _
    $region13: #{model_bce_forward.1} parent=1 // pred_fallthru
      _
    // Predicated region
    $region14: #{model_bce_forward.1} parent=1 // pred_check
      _
    $region15: #{model_bce_forward.1} parent=1 // pred_check_branch
      %20 = sbr.rel (0) target = $region17
    $region16: #{model_bce_forward.1} parent=1 // pred_region
      _
    $region17: #{model_bce_forward.1} parent=1 // pred_fallthru
      _
    // Predicated region
    $region18: #{model_bce_forward.1} parent=1 // pred_check
      _
    $region19: #{model_bce_forward.1} parent=1 // pred_check_branch
      %22 = sbr.rel (0) target = $region21
    $region20: #{model_bce_forward.1} parent=1 // pred_region
      _
    $region21: #{model_bce_forward.1} parent=1 // pred_fallthru
      _
    %v24 = vld [vmem:[%s3] sm:$0x1]
    %v25 = vld [vmem:[%s3 + $0x1] sm:$0x1]
    %v26 = vld [vmem:[%s3 + $0x2] sm:$0x1]
    %v27 = vld [vmem:[%s3 + $0x3] sm:$0x1]
    %v28 = vld [vmem:[%s3 + $0x4] sm:$0x1]
    %v29 = vld [vmem:[%s3 + $0x5] sm:$0x1]
    %v30 = vld [vmem:[%s3 + $0x6] sm:$0x1]
    %v31 = vld [vmem:[%s3 + $0x7] sm:$0x1]
    %v32 = vld [vmem:[%s3 + $0x8] sm:$0x1]
    %v33 = vld [vmem:[%s3 + $0x9] sm:$0x1]
    %v34 = vld [vmem:[%s3 + $0xa] sm:$0x1]
    %v35 = vld [vmem:[%s3 + $0xb] sm:$0x1]
    %v36 = vld [vmem:[%s3 + $0xc] sm:$0x1]
    %v37 = vld [vmem:[%s4] sm:$0xf]
    %v38 = vld [vmem:[%s4 + $0x14] sm:$0xf]
    %v39 = vld [vmem:[%s4 + $0x28] sm:$0xf]
    %v40 = vld [vmem:[%s4 + $0x3c] sm:$0xf]
    %v41 = vld [vmem:[%s4 + $0x4] sm:$0xf]
    %v42 = vld [vmem:[%s4 + $0x18] sm:$0xf]
    %v43 = vld [vmem:[%s4 + $0x2c] sm:$0xf]
    %v44 = vld [vmem:[%s4 + $0x40] sm:$0xf]
    %v45 = vld [vmem:[%s4 + $0x8] sm:$0xf]
    %v46 = vld [vmem:[%s4 + $0x1c] sm:$0xf]
    %v47 = vld [vmem:[%s4 + $0x30] sm:$0xf]
    %v48 = vld [vmem:[%s4 + $0x44] sm:$0xf]
    %v49 = vld [vmem:[%s4 + $0xc] sm:$0xf]
    %v50 = vld [vmem:[%s4 + $0x20] sm:$0xf]
    %v51 = vld [vmem:[%s4 + $0x34] sm:$0xf]
    %v52 = vld [vmem:[%s4 + $0x48] sm:$0xf]
    %v53 = vld [vmem:[%s4 + $0x10] sm:$0xf]
    %v54 = vld [vmem:[%s4 + $0x24] sm:$0xf]
    %v55 = vld [vmem:[%s4 + $0x38] sm:$0xf]
    %v56 = vld [vmem:[%s4 + $0x4c] sm:$0xf]
    %v57 = vld [vmem:[%s4 + $0x60] sm:$0xf]
    %v58 = vld [vmem:[%s4 + $0x74] sm:$0xf]
    %v59 = vld [vmem:[%s4 + $0x88] sm:$0xf]
    %v60 = vld [vmem:[%s4 + $0x9c] sm:$0xf]
    %v61 = vld [vmem:[%s0] sm:$0xff]
    %v62 = vld [vmem:[%s0 + $0x8] sm:$0xff]
    %vm63 = vcmask 261120
    %v64 = vsel %vm63, %v61, 0.0
    %65 = vadd.xlane.f32.xlu0 %v64
    %v66 = vpop.xlane.xlu0 %65
    %v67 = vsel %vm63, %v62, 0.0
    %68 = vadd.xlane.f32.xlu0 %v67
    %v69 = vpop.xlane.xlu0 %68
    %v70 = vrcp.pop 32.0
    %v71 = vmul.f32 32.0, %v70
    %v72 = vsub.f32 1.0, %v71
    %v73 = vmul.f32 %v70, %v72
    %v74 = vadd.f32 %v70, %v73
    %vm75 = vweird.f32 %v70
    %v76 = vsel %vm75, %v70, %v74
    %v77 = vmul.f32 %v66, %v76
    %v78 = vmul.f32 %v69, %v76
    %v79 = vsub.f32 %v61, %v77
    %v80 = vsub.f32 %v62, %v78
    %v81 = vmul.f32 %v79, %v79
    %v82 = vmul.f32 %v80, %v80
    %v83 = vsel %vm63, %v81, 0.0
    %84 = vadd.xlane.f32.xlu0 %v83
    %v85 = vpop.xlane.xlu0 %84
    %v86 = vsel %vm63, %v82, 0.0
    %87 = vadd.xlane.f32.xlu0 %v86
    %v88 = vpop.xlane.xlu0 %87
    %v89 = vmul.f32 %v85, %v76
    %v90 = vmul.f32 %v88, %v76
    %v91 = vadd.f32 %v89, 1e-05
    %v92 = vadd.f32 %v90, 1e-05
    %v93 = vrsqrt.pop %v91
    %v94 = vmul.f32 %v93, %v91
    %v95 = vmul.f32 %v94, %v93
    %v96 = vmul.f32 0.5, %v95
    %v97 = vsub.f32 1.5, %v96
    %v98 = vmul.f32 %v93, %v97
    %vm99 = vweird.f32 %v91
    %vm100 = vweird.f32 %v93
    %vm101 = vmor %vm99, %vm100
    %v102 = vsel %vm101, %v93, %v98
    %v103 = vrsqrt.pop %v92
    %v104 = vmul.f32 %v103, %v92
    %v105 = vmul.f32 %v104, %v103
    %v106 = vmul.f32 0.5, %v105
    %v107 = vsub.f32 1.5, %v106
    %v108 = vmul.f32 %v103, %v107
    %vm109 = vweird.f32 %v92
    %vm110 = vweird.f32 %v103
    %vm111 = vmor %vm109, %vm110
    %v112 = vsel %vm111, %v103, %v108
    %v113 = vmul.f32 %v79, %v102
    %v114 = vmul.f32 %v80, %v112
    %v115 = vperm.slane %v24, 0
    %v116 = vmul.f32 %v113, %v115
    %v117 = vmul.f32 %v114, %v115
    %v118 = vperm.slane %v25, 0
    %v119 = vadd.f32 %v116, %v118
    %v120 = vadd.f32 %v117, %v118
    %v121 = vpack.c.bf16 %v120, %v119
    %v122 = vperm.slane %v26, 0
    %v127 = vunpack.c.l.b16 %v37
    %v128 = vunpack.c.l.b16 %v38
    %v129 = vunpack.c.l.b16 %v39
    %v130 = vunpack.c.l.b16 %v40
    %v131 = vpack.c.b16 %v128, %v127
    %v132 = vpack.c.b16 %v130, %v129
    %v136 = vsel %vm63, %v121, 0
    %138 = vmatpush.bf16.msra.mxu0 0
    %139 = vmatpush.bf16.msra.mxu0 0
    %140 = vmatpush.bf16.msra.mxu0 0
    %141 = vmatpush.bf16.msra.mxu0 0
    %142 = vmatpush.bf16.msra.mxu0 0
    %143 = vmatpush.bf16.msra.mxu0 0
    %144 = vmatpush.bf16.msra.mxu0 %v132
    %145 = vmatpush.bf16.msra.mxu0 %v131
    %146 = vmatmul.bf16.gmra.mxu0 %v136
    %v147 = vpop.f32.mrf.mxu0
    %v148 = vadd.f32 %v122, %v147
    %v149 = vpop.f32.mrf.mxu0
    %v150 = vadd.f32 %v122, %v149
    %151 = vdwg.mxu0
    %v152 = vpack.c.bf16 %v148, %v148
    %v153 = vpack.c.bf16 %v150, %v150
    %vm154 = vcmask 781312
    %155 = vst.msk [vmem:[#allocation2] sm:$0xf] %vm154, %v152
    %156 = vst.msk [vmem:[#allocation2 + $0x4] sm:$0xf] %vm154, %v153
    %v157 = vld [vmem:[%s1] sm:$0x1]
    %v158 = vld [vmem:[%s1 + $0x1] sm:$0x1]
    %v161 = vperm.slane %v157, 0
    %v162 = vperm.slane %v158, 0
    %v165 = vld [vmem:[#allocation2] sm:$0xf]
    %v166 = vld [vmem:[#allocation2 + $0x4] sm:$0xf]
    %v168 = vunpack.c.l.b16 %v165
    %v169 = vpack.c.b16 %v168, %v168
    %170 = vrot.lane.b32.xlu0 %v169, 96
    %v171 = vpop.permute.xlu0 %170
    %vm172 = vcmask 64512
    %v174 = vsel %vm172, %v165, 0
    %v177 = vsel %vm172, %v171, 0
    %179 = vmatpush.bf16.xpose.msra.mxu0 0
    %180 = vmatpush.bf16.xpose.msra.mxu0 0
    %181 = vmatpush.bf16.xpose.msra.mxu0 0
    %182 = vmatpush.bf16.xpose.msra.mxu0 0
    %183 = vmatpush.bf16.xpose.msra.mxu0 0
    %184 = vmatpush.bf16.xpose.msra.mxu0 0
    %185 = vmatpush.bf16.xpose.msra.mxu0 0
    %186 = vmatpush.bf16.xpose.msra.mxu0 %v177
    %187 = vmatmul.bf16.gmra.mxu0 %v174
    %v188 = vpop.f32.mrf.mxu0
    %v189 = vadd.f32 0.0, %v188
    %v190 = vpop.f32.mrf.mxu0
    %191 = vdwg.mxu0
    %v193 = vunpack.c.l.b16 %v166
    %v194 = vpack.c.b16 %v193, %v193
    %195 = vrot.lane.b32.xlu0 %v194, 96
    %v196 = vpop.permute.xlu0 %195
    %v198 = vsel %vm172, %v166, 0
    %v201 = vsel %vm172, %v196, 0
    %203 = vmatpush.bf16.xpose.msra.mxu0 0
    %204 = vmatpush.bf16.xpose.msra.mxu0 0
    %205 = vmatpush.bf16.xpose.msra.mxu0 0
    %206 = vmatpush.bf16.xpose.msra.mxu0 0
    %207 = vmatpush.bf16.xpose.msra.mxu0 0
    %208 = vmatpush.bf16.xpose.msra.mxu0 0
    %209 = vmatpush.bf16.xpose.msra.mxu0 0
    %210 = vmatpush.bf16.xpose.msra.mxu0 %v201
    %211 = vmatmul.bf16.gmra.mxu0 %v198
    %v212 = vpop.f32.mrf.mxu0
    %v213 = vadd.f32 0.0, %v212
    %v214 = vpop.f32.mrf.mxu0
    %215 = vdwg.mxu0
    %v216 = vmul.f32 %v189, 0.35355338
    %v217 = vmul.f32 %v213, 0.35355338
    %v218 = vadd.f32 %v216, %v161
    %v219 = vadd.f32 %v217, %v162
    %v220 = vsel %vm172, %v218, -inf
    %221 = vmax.xlane.f32.xlu0 %v220
    %v222 = vpop.xlane.xlu0 %221
    %v223 = vsel %vm172, %v219, -inf
    %224 = vmax.xlane.f32.xlu0 %v223
    %v225 = vpop.xlane.xlu0 %224
    %v226 = vsub.f32 %v218, %v222
    %v227 = vsub.f32 %v219, %v225
    %v228 = vmul.f32 %v226, 1.442695
    %v229 = vpow.pop %v228
    %v230 = vmul.f32 %v227, 1.442695
    %v231 = vpow.pop %v230
    %v232 = vsel %vm172, %v229, 0.0
    %233 = vadd.xlane.f32.xlu0 %v232
    %v234 = vpop.xlane.xlu0 %233
    %v235 = vsel %vm172, %v231, 0.0
    %236 = vadd.xlane.f32.xlu0 %v235
    %v237 = vpop.xlane.xlu0 %236
    %v238 = vrcp.pop %v234
    %v239 = vrcp.pop %v237
    %v240 = vmul.f32 %v229, %v238
    %v241 = vmul.f32 %v231, %v239
    %v242 = vpack.c.bf16 %v240, %v240
    %v243 = vpack.c.bf16 %v241, %v241
    %244 = vrot.lane.b32.xlu0 %v169, 64
    %v245 = vpop.permute.xlu0 %244
    %v247 = vsel %vm172, %v242, 0
    %vm249 = vcmask 1043456
    %v251 = vsel %vm249, %v245, 0
    %253 = vmatpush.bf16.msra.mxu0 0
    %254 = vmatpush.bf16.msra.mxu0 0
    %255 = vmatpush.bf16.msra.mxu0 0
    %256 = vmatpush.bf16.msra.mxu0 0
    %257 = vmatpush.bf16.msra.mxu0 0
    %258 = vmatpush.bf16.msra.mxu0 0
    %259 = vmatpush.bf16.msra.mxu0 0
    %260 = vmatpush.bf16.msra.mxu0 %v251
    %261 = vmatmul.bf16.gmra.mxu0 %v247
    %v262 = vpop.f32.mrf.mxu0
    %v263 = vadd.f32 0.0, %v262
    %v264 = vpop.f32.mrf.mxu0
    %265 = vdwg.mxu0
    %266 = vrot.lane.b32.xlu0 %v194, 64
    %v267 = vpop.permute.xlu0 %266
    %v269 = vsel %vm172, %v243, 0
    %v272 = vsel %vm249, %v267, 0
    %274 = vmatpush.bf16.msra.mxu0 0
    %275 = vmatpush.bf16.msra.mxu0 0
    %276 = vmatpush.bf16.msra.mxu0 0
    %277 = vmatpush.bf16.msra.mxu0 0
    %278 = vmatpush.bf16.msra.mxu0 0
    %279 = vmatpush.bf16.msra.mxu0 0
    %280 = vmatpush.bf16.msra.mxu0 0
    %281 = vmatpush.bf16.msra.mxu0 %v272
    %282 = vmatmul.bf16.gmra.mxu0 %v269
    %v283 = vpop.f32.mrf.mxu0
    %v284 = vadd.f32 0.0, %v283
    %v285 = vpop.f32.mrf.mxu0
    %286 = vdwg.mxu0
    %287 = vst.msk [vmem:[#allocation3] sm:$0xff] %vm172, %v263
    %288 = vst.msk [vmem:[#allocation3 + $0x8] sm:$0xff] %vm172, %v284
    %v289 = vld [vmem:[#allocation2] sm:$0xf]
    %v290 = vld [vmem:[#allocation2 + $0x4] sm:$0xf]
    %v292 = vunpack.c.l.b16 %v289
    %v293 = vpack.c.b16 %v292, %v292
    %294 = vrot.lane.b32.xlu0 %v293, 120
    %v295 = vpop.permute.xlu0 %294
    %296 = vrot.lane.b32.xlu0 %v293, 88
    %v297 = vpop.permute.xlu0 %296
    %v299 = vsel %vm172, %v295, 0
    %v302 = vsel %vm172, %v297, 0
    %304 = vmatpush.bf16.xpose.msra.mxu0 0
    %305 = vmatpush.bf16.xpose.msra.mxu0 0
    %306 = vmatpush.bf16.xpose.msra.mxu0 0
    %307 = vmatpush.bf16.xpose.msra.mxu0 0
    %308 = vmatpush.bf16.xpose.msra.mxu0 0
    %309 = vmatpush.bf16.xpose.msra.mxu0 0
    %310 = vmatpush.bf16.xpose.msra.mxu0 0
    %311 = vmatpush.bf16.xpose.msra.mxu0 %v302
    %312 = vmatmul.bf16.gmra.mxu0 %v299
    %v313 = vpop.f32.mrf.mxu0
    %v314 = vadd.f32 0.0, %v313
    %v315 = vpop.f32.mrf.mxu0
    %316 = vdwg.mxu0
    %v318 = vunpack.c.l.b16 %v290
    %v319 = vpack.c.b16 %v318, %v318
    %320 = vrot.lane.b32.xlu0 %v319, 120
    %v321 = vpop.permute.xlu0 %320
    %322 = vrot.lane.b32.xlu0 %v319, 88
    %v323 = vpop.permute.xlu0 %322
    %v325 = vsel %vm172, %v321, 0
    %v328 = vsel %vm172, %v323, 0
    %330 = vmatpush.bf16.xpose.msra.mxu0 0
    %331 = vmatpush.bf16.xpose.msra.mxu0 0
    %332 = vmatpush.bf16.xpose.msra.mxu0 0
    %333 = vmatpush.bf16.xpose.msra.mxu0 0
    %334 = vmatpush.bf16.xpose.msra.mxu0 0
    %335 = vmatpush.bf16.xpose.msra.mxu0 0
    %336 = vmatpush.bf16.xpose.msra.mxu0 0
    %337 = vmatpush.bf16.xpose.msra.mxu0 %v328
    %338 = vmatmul.bf16.gmra.mxu0 %v325
    %v339 = vpop.f32.mrf.mxu0
    %v340 = vadd.f32 0.0, %v339
    %v341 = vpop.f32.mrf.mxu0
    %342 = vdwg.mxu0
    %v343 = vmul.f32 %v314, 0.35355338
    %v344 = vmul.f32 %v340, 0.35355338
    %v345 = vadd.f32 %v343, %v161
    %v346 = vadd.f32 %v344, %v162
    %v347 = vsel %vm172, %v345, -inf
    %348 = vmax.xlane.f32.xlu0 %v347
    %v349 = vpop.xlane.xlu0 %348
    %v350 = vsel %vm172, %v346, -inf
    %351 = vmax.xlane.f32.xlu0 %v350
    %v352 = vpop.xlane.xlu0 %351
    %v353 = vsub.f32 %v345, %v349
    %v354 = vsub.f32 %v346, %v352
    %v355 = vmul.f32 %v353, 1.442695
    %v356 = vpow.pop %v355
    %v357 = vmul.f32 %v354, 1.442695
    %v358 = vpow.pop %v357
    %v359 = vsel %vm172, %v356, 0.0
    %360 = vadd.xlane.f32.xlu0 %v359
    %v361 = vpop.xlane.xlu0 %360
    %v362 = vsel %vm172, %v358, 0.0
    %363 = vadd.xlane.f32.xlu0 %v362
    %v364 = vpop.xlane.xlu0 %363
    %v365 = vrcp.pop %v361
    %v366 = vrcp.pop %v364
    %v367 = vmul.f32 %v356, %v365
    %v368 = vmul.f32 %v358, %v366
    %v369 = vpack.c.bf16 %v367, %v367
    %v370 = vpack.c.bf16 %v368, %v368
    %371 = vrot.lane.b32.xlu0 %v293, 56
    %v372 = vpop.permute.xlu0 %371
    %v374 = vsel %vm172, %v369, 0
    %v377 = vsel %vm249, %v372, 0
    %379 = vmatpush.bf16.msra.mxu0 0
    %380 = vmatpush.bf16.msra.mxu0 0
    %381 = vmatpush.bf16.msra.mxu0 0
    %382 = vmatpush.bf16.msra.mxu0 0
    %383 = vmatpush.bf16.msra.mxu0 0
    %384 = vmatpush.bf16.msra.mxu0 0
    %385 = vmatpush.bf16.msra.mxu0 0
    %386 = vmatpush.bf16.msra.mxu0 %v377
    %387 = vmatmul.bf16.gmra.mxu0 %v374
    %v388 = vpop.f32.mrf.mxu0
    %v389 = vadd.f32 0.0, %v388
    %v390 = vpop.f32.mrf.mxu0
    %391 = vdwg.mxu0
    %392 = vrot.lane.b32.xlu0 %v319, 56
    %v393 = vpop.permute.xlu0 %392
    %v395 = vsel %vm172, %v370, 0
    %v398 = vsel %vm249, %v393, 0
    %400 = vmatpush.bf16.msra.mxu0 0
    %401 = vmatpush.bf16.msra.mxu0 0
    %402 = vmatpush.bf16.msra.mxu0 0
    %403 = vmatpush.bf16.msra.mxu0 0
    %404 = vmatpush.bf16.msra.mxu0 0
    %405 = vmatpush.bf16.msra.mxu0 0
    %406 = vmatpush.bf16.msra.mxu0 0
    %407 = vmatpush.bf16.msra.mxu0 %v398
    %408 = vmatmul.bf16.gmra.mxu0 %v395
    %v409 = vpop.f32.mrf.mxu0
    %v410 = vadd.f32 0.0, %v409
    %v411 = vpop.f32.mrf.mxu0
    %412 = vdwg.mxu0
    %415 = vrot.lane.b32.xlu0 %v389, 8
    %v416 = vpop.permute.xlu0 %415
    %417 = vrot.lane.b32.xlu0 %v410, 8
    %v418 = vpop.permute.xlu0 %417
    %vm421 = vcmask 130112
    %422 = vst.msk [vmem:[#allocation3] sm:$0xff] %vm421, %v416
    %423 = vst.msk [vmem:[#allocation3 + $0x8] sm:$0xff] %vm421, %v418
    %v424 = vld [vmem:[#allocation2] sm:$0xf]
    %v425 = vld [vmem:[#allocation2 + $0x4] sm:$0xf]
    %v427 = vunpack.c.l.b16 %v424
    %v428 = vpack.c.b16 %v427, %v427
    %429 = vrot.lane.b32.xlu0 %v428, 112
    %v430 = vpop.permute.xlu0 %429
    %431 = vrot.lane.b32.xlu0 %v428, 80
    %v432 = vpop.permute.xlu0 %431
    %v434 = vsel %vm172, %v430, 0
    %v437 = vsel %vm172, %v432, 0
    %439 = vmatpush.bf16.xpose.msra.mxu0 0
    %440 = vmatpush.bf16.xpose.msra.mxu0 0
    %441 = vmatpush.bf16.xpose.msra.mxu0 0
    %442 = vmatpush.bf16.xpose.msra.mxu0 0
    %443 = vmatpush.bf16.xpose.msra.mxu0 0
    %444 = vmatpush.bf16.xpose.msra.mxu0 0
    %445 = vmatpush.bf16.xpose.msra.mxu0 0
    %446 = vmatpush.bf16.xpose.msra.mxu0 %v437
    %447 = vmatmul.bf16.gmra.mxu0 %v434
    %v448 = vpop.f32.mrf.mxu0
    %v449 = vadd.f32 0.0, %v448
    %v450 = vpop.f32.mrf.mxu0
    %451 = vdwg.mxu0
    %v453 = vunpack.c.l.b16 %v425
    %v454 = vpack.c.b16 %v453, %v453
    %455 = vrot.lane.b32.xlu0 %v454, 112
    %v456 = vpop.permute.xlu0 %455
    %457 = vrot.lane.b32.xlu0 %v454, 80
    %v458 = vpop.permute.xlu0 %457
    %v460 = vsel %vm172, %v456, 0
    %v463 = vsel %vm172, %v458, 0
    %465 = vmatpush.bf16.xpose.msra.mxu0 0
    %466 = vmatpush.bf16.xpose.msra.mxu0 0
    %467 = vmatpush.bf16.xpose.msra.mxu0 0
    %468 = vmatpush.bf16.xpose.msra.mxu0 0
    %469 = vmatpush.bf16.xpose.msra.mxu0 0
    %470 = vmatpush.bf16.xpose.msra.mxu0 0
    %471 = vmatpush.bf16.xpose.msra.mxu0 0
    %472 = vmatpush.bf16.xpose.msra.mxu0 %v463
    %473 = vmatmul.bf16.gmra.mxu0 %v460
    %v474 = vpop.f32.mrf.mxu0
    %v475 = vadd.f32 0.0, %v474
    %v476 = vpop.f32.mrf.mxu0
    %477 = vdwg.mxu0
    %v478 = vmul.f32 %v449, 0.35355338
    %v479 = vmul.f32 %v475, 0.35355338
    %v480 = vadd.f32 %v478, %v161
    %v481 = vadd.f32 %v479, %v162
    %v482 = vsel %vm172, %v480, -inf
    %483 = vmax.xlane.f32.xlu0 %v482
    %v484 = vpop.xlane.xlu0 %483
    %v485 = vsel %vm172, %v481, -inf
    %486 = vmax.xlane.f32.xlu0 %v485
    %v487 = vpop.xlane.xlu0 %486
    %v488 = vsub.f32 %v480, %v484
    %v489 = vsub.f32 %v481, %v487
    %v490 = vmul.f32 %v488, 1.442695
    %v491 = vpow.pop %v490
    %v492 = vmul.f32 %v489, 1.442695
    %v493 = vpow.pop %v492
    %v494 = vsel %vm172, %v491, 0.0
    %495 = vadd.xlane.f32.xlu0 %v494
    %v496 = vpop.xlane.xlu0 %495
    %v497 = vsel %vm172, %v493, 0.0
    %498 = vadd.xlane.f32.xlu0 %v497
    %v499 = vpop.xlane.xlu0 %498
    %v500 = vrcp.pop %v496
    %v501 = vrcp.pop %v499
    %v502 = vmul.f32 %v491, %v500
    %v503 = vmul.f32 %v493, %v501
    %v504 = vpack.c.bf16 %v502, %v502
    %v505 = vpack.c.bf16 %v503, %v503
    %506 = vrot.lane.b32.xlu0 %v428, 48
    %v507 = vpop.permute.xlu0 %506
    %v509 = vsel %vm172, %v504, 0
    %v512 = vsel %vm249, %v507, 0
    %514 = vmatpush.bf16.msra.mxu0 0
    %515 = vmatpush.bf16.msra.mxu0 0
    %516 = vmatpush.bf16.msra.mxu0 0
    %517 = vmatpush.bf16.msra.mxu0 0
    %518 = vmatpush.bf16.msra.mxu0 0
    %519 = vmatpush.bf16.msra.mxu0 0
    %520 = vmatpush.bf16.msra.mxu0 0
    %521 = vmatpush.bf16.msra.mxu0 %v512
    %522 = vmatmul.bf16.gmra.mxu0 %v509
    %v523 = vpop.f32.mrf.mxu0
    %v524 = vadd.f32 0.0, %v523
    %v525 = vpop.f32.mrf.mxu0
    %526 = vdwg.mxu0
    %527 = vrot.lane.b32.xlu0 %v454, 48
    %v528 = vpop.permute.xlu0 %527
    %v530 = vsel %vm172, %v505, 0
    %v533 = vsel %vm249, %v528, 0
    %535 = vmatpush.bf16.msra.mxu0 0
    %536 = vmatpush.bf16.msra.mxu0 0
    %537 = vmatpush.bf16.msra.mxu0 0
    %538 = vmatpush.bf16.msra.mxu0 0
    %539 = vmatpush.bf16.msra.mxu0 0
    %540 = vmatpush.bf16.msra.mxu0 0
    %541 = vmatpush.bf16.msra.mxu0 0
    %542 = vmatpush.bf16.msra.mxu0 %v533
    %543 = vmatmul.bf16.gmra.mxu0 %v530
    %v544 = vpop.f32.mrf.mxu0
    %v545 = vadd.f32 0.0, %v544
    %v546 = vpop.f32.mrf.mxu0
    %547 = vdwg.mxu0
    %550 = vrot.lane.b32.xlu0 %v524, 16
    %v551 = vpop.permute.xlu0 %550
    %552 = vrot.lane.b32.xlu0 %v545, 16
    %v553 = vpop.permute.xlu0 %552
    %vm556 = vcmask 195712
    %557 = vst.msk [vmem:[#allocation3] sm:$0xff] %vm556, %v551
    %558 = vst.msk [vmem:[#allocation3 + $0x8] sm:$0xff] %vm556, %v553
    %v559 = vld [vmem:[#allocation2] sm:$0xf]
    %v560 = vld [vmem:[#allocation2 + $0x4] sm:$0xf]
    %v562 = vunpack.c.l.b16 %v559
    %v563 = vpack.c.b16 %v562, %v562
    %564 = vrot.lane.b32.xlu0 %v563, 104
    %v565 = vpop.permute.xlu0 %564
    %566 = vrot.lane.b32.xlu0 %v563, 72
    %v567 = vpop.permute.xlu0 %566
    %v569 = vsel %vm172, %v565, 0
    %v572 = vsel %vm172, %v567, 0
    %574 = vmatpush.bf16.xpose.msra.mxu0 0
    %575 = vmatpush.bf16.xpose.msra.mxu0 0
    %576 = vmatpush.bf16.xpose.msra.mxu0 0
    %577 = vmatpush.bf16.xpose.msra.mxu0 0
    %578 = vmatpush.bf16.xpose.msra.mxu0 0
    %579 = vmatpush.bf16.xpose.msra.mxu0 0
    %580 = vmatpush.bf16.xpose.msra.mxu0 0
    %581 = vmatpush.bf16.xpose.msra.mxu0 %v572
    %582 = vmatmul.bf16.gmra.mxu0 %v569
    %v583 = vpop.f32.mrf.mxu0
    %v584 = vadd.f32 0.0, %v583
    %v585 = vpop.f32.mrf.mxu0
    %586 = vdwg.mxu0
    %v588 = vunpack.c.l.b16 %v560
    %v589 = vpack.c.b16 %v588, %v588
    %590 = vrot.lane.b32.xlu0 %v589, 104
    %v591 = vpop.permute.xlu0 %590
    %592 = vrot.lane.b32.xlu0 %v589, 72
    %v593 = vpop.permute.xlu0 %592
    %v595 = vsel %vm172, %v591, 0
    %v598 = vsel %vm172, %v593, 0
    %600 = vmatpush.bf16.xpose.msra.mxu0 0
    %601 = vmatpush.bf16.xpose.msra.mxu0 0
    %602 = vmatpush.bf16.xpose.msra.mxu0 0
    %603 = vmatpush.bf16.xpose.msra.mxu0 0
    %604 = vmatpush.bf16.xpose.msra.mxu0 0
    %605 = vmatpush.bf16.xpose.msra.mxu0 0
    %606 = vmatpush.bf16.xpose.msra.mxu0 0
    %607 = vmatpush.bf16.xpose.msra.mxu0 %v598
    %608 = vmatmul.bf16.gmra.mxu0 %v595
    %v609 = vpop.f32.mrf.mxu0
    %v610 = vadd.f32 0.0, %v609
    %v611 = vpop.f32.mrf.mxu0
    %612 = vdwg.mxu0
    %v613 = vmul.f32 %v584, 0.35355338
    %v614 = vmul.f32 %v610, 0.35355338
    %v615 = vadd.f32 %v613, %v161
    %v616 = vadd.f32 %v614, %v162
    %v617 = vsel %vm172, %v615, -inf
    %618 = vmax.xlane.f32.xlu0 %v617
    %v619 = vpop.xlane.xlu0 %618
    %v620 = vsel %vm172, %v616, -inf
    %621 = vmax.xlane.f32.xlu0 %v620
    %v622 = vpop.xlane.xlu0 %621
    %v623 = vsub.f32 %v615, %v619
    %v624 = vsub.f32 %v616, %v622
    %v625 = vmul.f32 %v623, 1.442695
    %v626 = vpow.pop %v625
    %v627 = vmul.f32 %v624, 1.442695
    %v628 = vpow.pop %v627
    %v629 = vsel %vm172, %v626, 0.0
    %630 = vadd.xlane.f32.xlu0 %v629
    %v631 = vpop.xlane.xlu0 %630
    %v632 = vsel %vm172, %v628, 0.0
    %633 = vadd.xlane.f32.xlu0 %v632
    %v634 = vpop.xlane.xlu0 %633
    %v635 = vrcp.pop %v631
    %v636 = vrcp.pop %v634
    %v637 = vmul.f32 %v626, %v635
    %v638 = vmul.f32 %v628, %v636
    %v639 = vpack.c.bf16 %v637, %v637
    %v640 = vpack.c.bf16 %v638, %v638
    %641 = vrot.lane.b32.xlu0 %v563, 40
    %v642 = vpop.permute.xlu0 %641
    %v644 = vsel %vm172, %v639, 0
    %v647 = vsel %vm249, %v642, 0
    %649 = vmatpush.bf16.msra.mxu0 0
    %650 = vmatpush.bf16.msra.mxu0 0
    %651 = vmatpush.bf16.msra.mxu0 0
    %652 = vmatpush.bf16.msra.mxu0 0
    %653 = vmatpush.bf16.msra.mxu0 0
    %654 = vmatpush.bf16.msra.mxu0 0
    %655 = vmatpush.bf16.msra.mxu0 0
    %656 = vmatpush.bf16.msra.mxu0 %v647
    %657 = vmatmul.bf16.gmra.mxu0 %v644
    %v658 = vpop.f32.mrf.mxu0
    %v659 = vadd.f32 0.0, %v658
    %v660 = vpop.f32.mrf.mxu0
    %661 = vdwg.mxu0
    %662 = vrot.lane.b32.xlu0 %v589, 40
    %v663 = vpop.permute.xlu0 %662
    %v665 = vsel %vm172, %v640, 0
    %v668 = vsel %vm249, %v663, 0
    %670 = vmatpush.bf16.msra.mxu0 0
    %671 = vmatpush.bf16.msra.mxu0 0
    %672 = vmatpush.bf16.msra.mxu0 0
    %673 = vmatpush.bf16.msra.mxu0 0
    %674 = vmatpush.bf16.msra.mxu0 0
    %675 = vmatpush.bf16.msra.mxu0 0
    %676 = vmatpush.bf16.msra.mxu0 0
    %677 = vmatpush.bf16.msra.mxu0 %v668
    %678 = vmatmul.bf16.gmra.mxu0 %v665
    %v679 = vpop.f32.mrf.mxu0
    %v680 = vadd.f32 0.0, %v679
    %v681 = vpop.f32.mrf.mxu0
    %682 = vdwg.mxu0
    %685 = vrot.lane.b32.xlu0 %v659, 24
    %v686 = vpop.permute.xlu0 %685
    %687 = vrot.lane.b32.xlu0 %v680, 24
    %v688 = vpop.permute.xlu0 %687
    %vm691 = vcmask 261312
    %692 = vst.msk [vmem:[#allocation3] sm:$0xff] %vm691, %v686
    %693 = vst.msk [vmem:[#allocation3 + $0x8] sm:$0xff] %vm691, %v688
    %v694 = vld [vmem:[#allocation3] sm:$0xff]
    %v695 = vld [vmem:[#allocation3 + $0x8] sm:$0xff]
    %v696 = vpack.c.bf16 %v695, %v694
    %v697 = vperm.slane %v27, 0
    %v702 = vunpack.c.l.b16 %v41
    %v703 = vunpack.c.l.b16 %v42
    %v704 = vunpack.c.l.b16 %v43
    %v705 = vunpack.c.l.b16 %v44
    %v706 = vpack.c.b16 %v703, %v702
    %v707 = vpack.c.b16 %v705, %v704
    %v711 = vsel %vm63, %v696, 0
    %713 = vmatpush.bf16.msra.mxu0 0
    %714 = vmatpush.bf16.msra.mxu0 0
    %715 = vmatpush.bf16.msra.mxu0 0
    %716 = vmatpush.bf16.msra.mxu0 0
    %717 = vmatpush.bf16.msra.mxu0 0
    %718 = vmatpush.bf16.msra.mxu0 0
    %719 = vmatpush.bf16.msra.mxu0 %v707
    %720 = vmatpush.bf16.msra.mxu0 %v706
    %721 = vmatmul.bf16.gmra.mxu0 %v711
    %v722 = vpop.f32.mrf.mxu0
    %v723 = vadd.f32 %v697, %v722
    %v724 = vpop.f32.mrf.mxu0
    %v725 = vadd.f32 %v697, %v724
    %726 = vdwg.mxu0
    %v727 = vadd.f32 %v119, %v723
    %v728 = vadd.f32 %v120, %v725
    %v729 = vsel %vm63, %v727, 0.0
    %730 = vadd.xlane.f32.xlu0 %v729
    %v731 = vpop.xlane.xlu0 %730
    %v732 = vsel %vm63, %v728, 0.0
    %733 = vadd.xlane.f32.xlu0 %v732
    %v734 = vpop.xlane.xlu0 %733
    %v735 = vmul.f32 %v731, %v76
    %v736 = vmul.f32 %v734, %v76
    %v737 = vsub.f32 %v727, %v735
    %v738 = vsub.f32 %v728, %v736
    %v739 = vmul.f32 %v737, %v737
    %v740 = vmul.f32 %v738, %v738
    %v741 = vsel %vm63, %v739, 0.0
    %742 = vadd.xlane.f32.xlu0 %v741
    %v743 = vpop.xlane.xlu0 %742
    %v744 = vsel %vm63, %v740, 0.0
    %745 = vadd.xlane.f32.xlu0 %v744
    %v746 = vpop.xlane.xlu0 %745
    %v747 = vmul.f32 %v743, %v76
    %v748 = vmul.f32 %v746, %v76
    %v749 = vadd.f32 %v747, 1e-05
    %v750 = vadd.f32 %v748, 1e-05
    %v751 = vrsqrt.pop %v749
    %v752 = vmul.f32 %v751, %v749
    %v753 = vmul.f32 %v752, %v751
    %v754 = vmul.f32 0.5, %v753
    %v755 = vsub.f32 1.5, %v754
    %v756 = vmul.f32 %v751, %v755
    %vm757 = vweird.f32 %v749
    %vm758 = vweird.f32 %v751
    %vm759 = vmor %vm757, %vm758
    %v760 = vsel %vm759, %v751, %v756
    %v761 = vrsqrt.pop %v750
    %v762 = vmul.f32 %v761, %v750
    %v763 = vmul.f32 %v762, %v761
    %v764 = vmul.f32 0.5, %v763
    %v765 = vsub.f32 1.5, %v764
    %v766 = vmul.f32 %v761, %v765
    %vm767 = vweird.f32 %v750
    %vm768 = vweird.f32 %v761
    %vm769 = vmor %vm767, %vm768
    %v770 = vsel %vm769, %v761, %v766
    %v771 = vmul.f32 %v737, %v760
    %v772 = vmul.f32 %v738, %v770
    %v773 = vperm.slane %v28, 0
    %v774 = vmul.f32 %v771, %v773
    %v775 = vmul.f32 %v772, %v773
    %v776 = vperm.slane %v29, 0
    %v777 = vadd.f32 %v774, %v776
    %v778 = vadd.f32 %v775, %v776
    %v779 = vpack.c.bf16 %v778, %v777
    %v780 = vperm.slane %v30, 0
    %v785 = vunpack.c.l.b16 %v45
    %v786 = vunpack.c.l.b16 %v46
    %v787 = vunpack.c.l.b16 %v47
    %v788 = vunpack.c.l.b16 %v48
    %v789 = vpack.c.b16 %v786, %v785
    %v790 = vpack.c.b16 %v788, %v787
    %v794 = vsel %vm63, %v779, 0
    %796 = vmatpush.bf16.msra.mxu0 0
    %797 = vmatpush.bf16.msra.mxu0 0
    %798 = vmatpush.bf16.msra.mxu0 0
    %799 = vmatpush.bf16.msra.mxu0 0
    %800 = vmatpush.bf16.msra.mxu0 0
    %801 = vmatpush.bf16.msra.mxu0 0
    %802 = vmatpush.bf16.msra.mxu0 %v790
    %803 = vmatpush.bf16.msra.mxu0 %v789
    %804 = vmatmul.bf16.gmra.mxu0 %v794
    %v805 = vpop.f32.mrf.mxu0
    %v806 = vadd.f32 %v780, %v805
    %v807 = vpop.f32.mrf.mxu0
    %v808 = vadd.f32 %v780, %v807
    %809 = vdwg.mxu0
    %v810 = vmul.f32 %v806, %v806
    %v811 = vmul.f32 %v808, %v808
    %v812 = vmul.f32 %v806, %v810
    %v813 = vmul.f32 %v808, %v811
    %v814 = vmul.f32 %v812, 0.044715
    %v815 = vmul.f32 %v813, 0.044715
    %v816 = vadd.f32 %v806, %v814
    %v817 = vadd.f32 %v808, %v815
    %v818 = vmul.f32 %v816, 0.7978846
    %v819 = vmul.f32 %v817, 0.7978846
    %v820 = vtanh.pop %v818
    %v821 = vtanh.pop %v819
    %v822 = vadd.f32 %v820, 1.0
    %v823 = vadd.f32 %v821, 1.0
    %v824 = vmul.f32 %v822, 0.5
    %v825 = vmul.f32 %v823, 0.5
    %v826 = vmul.f32 %v806, %v824
    %v827 = vmul.f32 %v808, %v825
    %v828 = vpack.c.bf16 %v827, %v826
    %v829 = vperm.slane %v31, 0
    %v838 = vunpack.c.l.b16 %v53
    %v839 = vunpack.c.l.b16 %v54
    %v840 = vunpack.c.l.b16 %v55
    %v841 = vunpack.c.l.b16 %v56
    %v842 = vunpack.c.l.b16 %v57
    %v843 = vunpack.c.l.b16 %v58
    %v844 = vunpack.c.l.b16 %v59
    %v845 = vunpack.c.l.b16 %v60
    %v846 = vpack.c.b16 %v839, %v838
    %v847 = vpack.c.b16 %v841, %v840
    %v848 = vpack.c.b16 %v843, %v842
    %v849 = vpack.c.b16 %v845, %v844
    %vm854 = vcmask 523264
    %v856 = vsel %vm854, %v828, 0
    %858 = vmatpush.bf16.msra.mxu0 0
    %859 = vmatpush.bf16.msra.mxu0 0
    %860 = vmatpush.bf16.msra.mxu0 0
    %861 = vmatpush.bf16.msra.mxu0 0
    %862 = vmatpush.bf16.msra.mxu0 %v849
    %863 = vmatpush.bf16.msra.mxu0 %v848
    %864 = vmatpush.bf16.msra.mxu0 %v847
    %865 = vmatpush.bf16.msra.mxu0 %v846
    %866 = vmatmul.bf16.gmra.mxu0 %v856
    %v867 = vpop.f32.mrf.mxu0
    %v868 = vadd.f32 %v829, %v867
    %v869 = vpop.f32.mrf.mxu0
    %v870 = vadd.f32 %v829, %v869
    %871 = vdwg.mxu0
    %v872 = vadd.f32 %v777, %v868
    %v873 = vadd.f32 %v778, %v870
    %v874 = vsel %vm63, %v872, 0.0
    %875 = vadd.xlane.f32.xlu0 %v874
    %v876 = vpop.xlane.xlu0 %875
    %v877 = vsel %vm63, %v873, 0.0
    %878 = vadd.xlane.f32.xlu0 %v877
    %v879 = vpop.xlane.xlu0 %878
    %v880 = vmul.f32 %v876, %v76
    %v881 = vmul.f32 %v879, %v76
    %v882 = vsub.f32 %v872, %v880
    %v883 = vsub.f32 %v873, %v881
    %v884 = vmul.f32 %v882, %v882
    %v885 = vmul.f32 %v883, %v883
    %v886 = vsel %vm63, %v884, 0.0
    %887 = vadd.xlane.f32.xlu0 %v886
    %v888 = vpop.xlane.xlu0 %887
    %v889 = vsel %vm63, %v885, 0.0
    %890 = vadd.xlane.f32.xlu0 %v889
    %v891 = vpop.xlane.xlu0 %890
    %v892 = vmul.f32 %v888, %v76
    %v893 = vmul.f32 %v891, %v76
    %v894 = vadd.f32 %v892, 1e-05
    %v895 = vadd.f32 %v893, 1e-05
    %v896 = vrsqrt.pop %v894
    %v897 = vmul.f32 %v896, %v894
    %v898 = vmul.f32 %v897, %v896
    %v899 = vmul.f32 0.5, %v898
    %v900 = vsub.f32 1.5, %v899
    %v901 = vmul.f32 %v896, %v900
    %vm902 = vweird.f32 %v894
    %vm903 = vweird.f32 %v896
    %vm904 = vmor %vm902, %vm903
    %v905 = vsel %vm904, %v896, %v901
    %v906 = vrsqrt.pop %v895
    %v907 = vmul.f32 %v906, %v895
    %v908 = vmul.f32 %v907, %v906
    %v909 = vmul.f32 0.5, %v908
    %v910 = vsub.f32 1.5, %v909
    %v911 = vmul.f32 %v906, %v910
    %vm912 = vweird.f32 %v895
    %vm913 = vweird.f32 %v906
    %vm914 = vmor %vm912, %vm913
    %v915 = vsel %vm914, %v906, %v911
    %v916 = vmul.f32 %v882, %v905
    %v917 = vmul.f32 %v883, %v915
    %v918 = vperm.slane %v32, 0
    %v919 = vmul.f32 %v916, %v918
    %v920 = vmul.f32 %v917, %v918
    %v921 = vperm.slane %v33, 0
    %v922 = vadd.f32 %v919, %v921
    %v923 = vadd.f32 %v920, %v921
    %v924 = vpack.c.bf16 %v922, %v922
    %v925 = vpack.c.bf16 %v923, %v923
    %v926 = vperm.slane %v34, 0
    %v929 = vunpack.c.l.b16 %v924
    %v930 = vunpack.c.l.b16 %v925
    %v931 = vrot.slane %v930, 7
    %vm932 = vcmask 1041409
    %v933 = vsel %vm932, %v931, %v929
    %v934 = vpack.c.b16 %v933, %v933
    %v939 = vunpack.c.l.b16 %v49
    %v940 = vunpack.c.l.b16 %v50
    %v941 = vunpack.c.l.b16 %v51
    %v942 = vunpack.c.l.b16 %v52
    %v943 = vpack.c.b16 %v940, %v939
    %v944 = vpack.c.b16 %v942, %v941
    %v948 = vsel %vm63, %v934, 0
    %950 = vmatpush.bf16.msra.mxu0 0
    %951 = vmatpush.bf16.msra.mxu0 0
    %952 = vmatpush.bf16.msra.mxu0 0
    %953 = vmatpush.bf16.msra.mxu0 0
    %954 = vmatpush.bf16.msra.mxu0 0
    %955 = vmatpush.bf16.msra.mxu0 0
    %956 = vmatpush.bf16.msra.mxu0 %v944
    %957 = vmatpush.bf16.msra.mxu0 %v943
    %958 = vmatmul.bf16.gmra.mxu0 %v948
    %v959 = vpop.f32.mrf.mxu0
    %v960 = vadd.f32 %v926, %v959
    %v961 = vpop.f32.mrf.mxu0
    %962 = vdwg.mxu0
    %v963 = vtanh.pop %v960
    %v964 = vperm.slane %v35, 0
    %v965 = vmul.f32 %v963, %v964
    %vm966 = vcmask 254976
    %v967 = vsel %vm966, %v965, 0.0
    %968 = vadd.xlane.f32.xlu0 %v967
    %v969 = vpop.xlane.xlu0 %968
    %v970 = vperm.slane %v36, 0
    %v971 = vadd.f32 %v969, %v970
    %v972 = vxor.u32 %v971, 2147483648
    %v973 = vmul.f32 %v972, 1.442695
    %v974 = vpow.pop %v973
    %v975 = vadd.f32 %v974, 1.0
    %v976 = vrcp.pop %v975
    %v977 = vmul.f32 %v975, %v976
    %v978 = vsub.f32 1.0, %v977
    %v979 = vmul.f32 %v976, %v978
    %v980 = vadd.f32 %v976, %v979
    %vm981 = vweird.f32 %v975
    %vm982 = vweird.f32 %v976
    %vm983 = vmor %vm981, %vm982
    %v984 = vsel %vm983, %v976, %v980
    %v985 = vand.u32 2147483647, %v975
    %vm986 = vcmp.eq.f32.partialorder %v985, 8.507059e+37
    %v987 = vand.u32 %v975, 2147483648
    %v988 = vor.u32 1.1754944e-38, %v987
    %v989 = vsel %vm986, %v988, %v984
    %v990 = vmul.f32 1.0, %v989
    %vm991 = vcmask 1024
    %992 = vst.msk [vmem:[%s5] sm:$0x3] %vm991, %v990
    %v993 = vld [vmem:[%s2] sm:$0x3]
    %v994 = vmax.f32 %v971, 0.0
    %v995 = vmul.f32 %v971, %v993
    %v996 = vsub.f32 %v994, %v995
    %v997 = vand.u32 2147483647, %v971
    %v998 = vsub.f32 0.0, %v997
    %v999 = vmul.f32 %v998, 1.442695
    %v1000 = vpow.pop %v999
    %v1001 = vadd.f32 %v1000, 1.0
    %v1002 = vlog2.pop %v1001
    %v1003 = vmul.f32 %v1002, 0.6931472
    %v1004 = vadd.f32 %v996, %v1003
    %v1005 = vsel %vm991, %v1004, 0.0
    %1006 = vadd.xlane.f32.xlu0 %v1005
    %v1007 = vpop.xlane.xlu0 %1006
    %v1008 = vrot.slane %v1007, 4
    %v1009 = vadd.f32 %v1007, %v1008
    %v1010 = vrot.slane %v1009, 2
    %v1011 = vadd.f32 %v1009, %v1010
    %v1012 = vrot.slane %v1011, 1
    %v1013 = vadd.f32 %v1011, %v1012
    %s1014 = vtos %v1013
    %v1015 = vstv %s1014
    %v1016 = vrcp.pop 2.0
    %v1017 = vmul.f32 2.0, %v1016
    %v1018 = vsub.f32 1.0, %v1017
    %v1019 = vmul.f32 %v1016, %v1018
    %v1020 = vadd.f32 %v1016, %v1019
    %vm1021 = vweird.f32 %v1016
    %v1022 = vsel %vm1021, %v1016, %v1020
    %v1023 = vmul.f32 %v1015, %v1022
    %vm1024 = vcmask 0
    %1025 = vst.msk [vmem:[#allocation4] sm:$0x1] %vm1024, %v1023
    // Predicated region
    $region22: #{model_bce_forward.1} parent=1 // pred_check
      _
    $region23: #{model_bce_forward.1} parent=1 // pred_check_branch
      %1027 = sbr.rel (0) target = $region25
    $region24: #{model_bce_forward.1} parent=1 // pred_region
      _
    $region25: #{model_bce_forward.1} parent=1 // pred_fallthru
      _
    // Predicated region
    $region26: #{model_bce_forward.1} parent=1 // pred_check
      _
    $region27: #{model_bce_forward.1} parent=1 // pred_check_branch
      %1029 = sbr.rel (0) target = $region29
    $region28: #{model_bce_forward.1} parent=1 // pred_region
      %1031 = vsyncadd [#allocation5], 0
      %s1033 = sshll.u32 [#allocation4], 4
      %s1034 = int_to_ptr.vmem [resolvable:$true] %s1033
      %s1035 = sshll.u32 %s6, 4
      %s1036 = int_to_ptr.hbm [resolvable:$true] %s1035
      %1038 = dma.vmem_to_hbm [thread:$0]  %s1034, 16, %s1036, [#allocation5]
    $region29: #{model_bce_forward.1} parent=1 // pred_fallthru
      _
    // Predicated region
    $region30: #{model_bce_forward.1} parent=1 // pred_check
      _
    $region31: #{model_bce_forward.1} parent=1 // pred_check_branch
      %1040 = sbr.rel (0) target = $region33
    $region32: #{model_bce_forward.1} parent=1 // pred_region
      _
    $region33: #{model_bce_forward.1} parent=1 // pred_fallthru
      _
    // Predicated region
    $region34: #{model_bce_forward.1} parent=1 // pred_check
      _
    $region35: #{model_bce_forward.1} parent=1 // pred_check_branch
      %1042 = sbr.rel (0) target = $region37
    $region36: #{model_bce_forward.1} parent=1 // pred_region
      %1044 = dma.done [#allocation5], 16
    $region37: #{model_bce_forward.1} parent=1 // pred_fallthru
      _
    %1045 = vsyncpa [#allocation5], 1

</llo_original>
